<compile_context>
chip_gen: v6e
topology: v6e:2x2x1
jax: 0.10.0
libtpu: 0.0.40
codegen_flags: <defaults>
</compile_context>

<pallas_src>
import math

import jax
import jax.numpy as jnp
from jax import lax
from jax.experimental import pallas as pl
from jax.experimental.pallas import tpu as pltpu


def _round_up(x, m):
    return (x + m - 1) // m * m


# Source gate blocks are packed [i, f, g, o]; destination slots are [i, f, o, g]
# so the kernel can run one sigmoid slab (i,f,o) and one tanh slab (g).
_GATE_SRC_FOR_DST = (0, 1, 3, 2)


def _pack_gates(w, H, Hp):
    """(R, 4H) [i,f,g,o] -> (R, 4Hp) [i,f,o,g], each gate left-aligned in Hp."""
    R = w.shape[0]
    out = jnp.zeros((R, 4 * Hp), w.dtype)
    for dst, src in enumerate(_GATE_SRC_FOR_DST):
        out = out.at[:, dst * Hp:dst * Hp + H].set(w[:, src * H:(src + 1) * H])
    return out


def _estimate_vmem_bytes(TT, BB, Ep, Hp, Op):
    bf16, f32 = 2, 4
    emb = TT * BB * Ep * bf16
    wx = Ep * 4 * Hp * bf16
    wh = Hp * 4 * Hp * bf16
    wout = Hp * Op * bf16
    bg = 8 * 4 * Hp * f32            # sublane-padded
    bout = 8 * Op * f32
    last = BB * 128 * 4              # lane-padded
    out = BB * Op * f32
    scratch = 3 * BB * Hp * f32
    # pipelined operands are double-buffered; scratch is resident
    return 2 * (emb + wx + wh + wout + bg + bout + last + out) + scratch


def lstm_block_kernel(emb_ref, wx_ref, wh_ref, bg_ref, last_ref,
                      wout_ref, bout_ref, logits_ref,
                      h_scr, c_scr, fin_scr):
    """One (batch block, time block) grid step of the LSTM recurrence.

    emb_ref:    (TT, BB, Ep) bf16  embedded tokens for this time block
    wx_ref:     (Ep, 4*Hp)   bf16  input->gate weights, gate order [i,f,o,g]
    wh_ref:     (Hp, 4*Hp)   bf16  hidden->gate weights, gate order [i,f,o,g]
    bg_ref:     (1, 4*Hp)    f32   combined gate biases
    last_ref:   (BB, 1)      i32   lengths-1 selector index (-1 => never hit)
    wout_ref:   (Hp, Op)     bf16  classifier weights
    bout_ref:   (1, Op)      f32   classifier bias
    logits_ref: (BB, Op)     f32   output (written on the last time block)
    h/c/fin:    (BB, Hp)     f32   VMEM scratch carried across time blocks
    """
    t_blk = pl.program_id(1)
    n_tblk = pl.num_programs(1)
    TT = emb_ref.shape[0]
    Hp = wh_ref.shape[0]

    @pl.when(t_blk == 0)
    def _():
        h_scr[...] = jnp.zeros_like(h_scr)
        c_scr[...] = jnp.zeros_like(c_scr)
        fin_scr[...] = jnp.zeros_like(fin_scr)

    last = last_ref[...]                      # (BB, 1) int32
    t0 = t_blk * TT

    def step(s, carry):
        h, c, fin = carry
        x_t = emb_ref[s]                      # (BB, Ep) bf16
        # Fused input + recurrent projection (two K=Hp MXU pushes). Weights are
        # read from their VMEM refs here (NOT hoisted) so they don't pin vregs
        # across the serial loop.
        gates = (jnp.dot(x_t, wx_ref[...], preferred_element_type=jnp.float32)
                 + jnp.dot(h.astype(wh_ref.dtype), wh_ref[...],
                           preferred_element_type=jnp.float32)
                 + bg_ref[...])
        # Gate order [i, f, o, g]: one sigmoid slab + one tanh slab (EUP).
        ifo = jax.nn.sigmoid(gates[:, :3 * Hp])
        g = jnp.tanh(gates[:, 3 * Hp:])
        i = ifo[:, 0 * Hp:1 * Hp]
        f = ifo[:, 1 * Hp:2 * Hp]
        o = ifo[:, 2 * Hp:3 * Hp]
        c = f * c + g * i
        h = o * jnp.tanh(c)
        # Select the hidden state at global step t == lengths-1.
        fin = jnp.where(last == t0 + s, h, fin)
        return (h, c, fin)

    h, c, fin = lax.fori_loop(0, TT, step,
                              (h_scr[...], c_scr[...], fin_scr[...]),
                              unroll=min(4, TT))
    h_scr[...] = h
    c_scr[...] = c
    fin_scr[...] = fin

    @pl.when(t_blk == n_tblk - 1)
    def _():
        logits = (jnp.dot(fin.astype(wout_ref.dtype), wout_ref[...],
                          preferred_element_type=jnp.float32) + bout_ref[...])
        logits_ref[...] = logits.astype(logits_ref.dtype)


def lstm_classifier_forward(x_tokens, embed_table, Wx, Wh, b_gates, Wout, bout,
                            pad_id=1, time_block=16):
    """x_tokens: (B, T) int32 token ids; pad token id == pad_id."""
    B, T = x_tokens.shape
    E = embed_table.shape[1]
    H = Wh.shape[0]
    O = Wout.shape[1]

    # ---- hardware-friendly padded sizes (zero padding is exact) ----
    Ep = _round_up(E, 128)
    Hp = _round_up(H, 128)   # TODO(synk): round to 256 on v6e/v7x when H > 128
    Op = _round_up(O, 128)
    Bp = _round_up(max(B, 8), 8)
    if Bp >= 16:
        Bp = _round_up(Bp, 16)
        BB = min(128, Bp // 2)       # >=2 batch blocks -> both v7x TCs get work
        Bp = _round_up(Bp, BB)
    else:
        BB = Bp

    # Time block: keep the streamed embedding tile <= ~4 MiB per buffer.
    tt_cap = max(1, (4 << 20) // (BB * Ep * 2))
    TT = max(1, min(time_block, T, tt_cap))
    Tp = _round_up(T, TT)

    # ---- pack & pad parameters (gate order becomes [i, f, o, g]) ----
    Wx_p = jnp.zeros((Ep, 4 * Hp), jnp.float32).at[:E].set(_pack_gates(Wx, H, Hp))
    Wh_p = jnp.zeros((Hp, 4 * Hp), jnp.float32).at[:H].set(_pack_gates(Wh, H, Hp))
    bg_p = _pack_gates(b_gates.reshape(1, 4 * H), H, Hp)               # (1, 4Hp)
    Wout_p = jnp.zeros((Hp, Op), jnp.float32).at[:H, :O].set(Wout)     # (Hp, Op)
    bout_p = jnp.zeros((1, Op), jnp.float32).at[0, :O].set(bout)       # (1, Op)

    # ---- glue (plain JAX): token padding + embedding gather ----
    embed_p = jnp.zeros((embed_table.shape[0], Ep),
                        jnp.float32).at[:, :E].set(embed_table)
    x_p = jnp.full((Bp, Tp), pad_id, x_tokens.dtype).at[:B, :T].set(x_tokens)
    emb = embed_p[x_p]                                       # (Bp, Tp, Ep) f32
    emb_t = jnp.transpose(emb, (1, 0, 2)).astype(jnp.bfloat16)  # (Tp, Bp, Ep)

    lengths = jnp.sum((x_p != pad_id).astype(jnp.int32), axis=1)        # (Bp,)
    if B == 1:
        # B==1 branch of the module: final = h after the full (real) T steps.
        last_idx = jnp.full((Bp,), T - 1, jnp.int32)
    else:
        # B>1 branch: final = h at index lengths-1 (pad rows get -1 => never).
        last_idx = (lengths - 1).astype(jnp.int32)
    last_idx = last_idx.reshape(Bp, 1)

    vmem_limit = _estimate_vmem_bytes(TT, BB, Ep, Hp, Op)
    vmem_limit = int(min(56 << 20, max(16 << 20, 2 * vmem_limit)))

    grid_spec = pltpu.PrefetchScalarGridSpec(
        num_scalar_prefetch=0,
        grid=(Bp // BB, Tp // TT),                       # time axis innermost
        in_specs=[
            pl.BlockSpec((TT, BB, Ep), lambda b, t: (t, b, 0)),   # embeddings
            pl.BlockSpec((Ep, 4 * Hp), lambda b, t: (0, 0)),      # Wx
            pl.BlockSpec((Hp, 4 * Hp), lambda b, t: (0, 0)),      # Wh
            pl.BlockSpec((1, 4 * Hp), lambda b, t: (0, 0)),       # gate bias
            pl.BlockSpec((BB, 1), lambda b, t: (b, 0)),           # last index
            pl.BlockSpec((Hp, Op), lambda b, t: (0, 0)),          # Wout
            pl.BlockSpec((1, Op), lambda b, t: (0, 0)),           # bout
        ],
        out_specs=pl.BlockSpec((BB, Op), lambda b, t: (b, 0)),
        scratch_shapes=[pltpu.VMEM((BB, Hp), jnp.float32)] * 3,   # h, c, fin
    )

    logits_p = pl.pallas_call(
        lstm_block_kernel,
        out_shape=jax.ShapeDtypeStruct((Bp, Op), jnp.float32),
        grid_spec=grid_spec,
        compiler_params=pltpu.CompilerParams(
            dimension_semantics=("parallel", "arbitrary"),
            vmem_limit_bytes=vmem_limit),
    )(emb_t,
      Wx_p.astype(jnp.bfloat16),
      Wh_p.astype(jnp.bfloat16),
      bg_p.astype(jnp.float32),
      last_idx,
      Wout_p.astype(jnp.bfloat16),
      bout_p)

    return logits_p[:B, :O]


def _reference_forward(x_tokens, embed_table, Wx, Wh, b_gates, Wout, bout,
                       pad_id=1):
    """Pure-JAX f32 reference matching the PyTorch module's forward."""
    B, T = x_tokens.shape
    H = Wh.shape[0]
    emb = embed_table[x_tokens]                              # (B, T, E)
    h = jnp.zeros((B, H), jnp.float32)
    c = jnp.zeros((B, H), jnp.float32)
    hs = []
    for t in range(T):
        gates = emb[:, t] @ Wx + h @ Wh + b_gates            # order [i,f,g,o]
        i = jax.nn.sigmoid(gates[:, 0 * H:1 * H])
        f = jax.nn.sigmoid(gates[:, 1 * H:2 * H])
        g = jnp.tanh(gates[:, 2 * H:3 * H])
        o = jax.nn.sigmoid(gates[:, 3 * H:4 * H])
        c = f * c + g * i
        h = o * jnp.tanh(c)
        hs.append(h)
    if B == 1:
        final = h
    else:
        hs = jnp.stack(hs, axis=1)                           # (B, T, H)
        lengths = jnp.sum((x_tokens != pad_id).astype(jnp.int32), axis=1)
        final = hs[jnp.arange(B), lengths - 1]
    return final @ Wout + bout


def init_params(key, vocab_size, embedding_dim, hidden_dim, output_dim):
    ks = jax.random.split(key, 8)
    E, H, O = embedding_dim, hidden_dim, output_dim

    # Embedding ~ N(0,1), padding_idx=1 row zeroed (PyTorch nn.Embedding default).
    embed_table = jax.random.normal(ks[0], (vocab_size, E), jnp.float32)
    embed_table = embed_table.at[1].set(0.0)

    # MyLSTMCell.reset_parameters: all weights/biases ~ U(-1/sqrt(H), 1/sqrt(H)).
    stdv = 1.0 / math.sqrt(H)
    # gate order [i, f, g, o]; stored pre-transposed as (in, out).
    Wx = jax.random.uniform(ks[1], (E, 4 * H), jnp.float32, -stdv, stdv)
    Wh = jax.random.uniform(ks[2], (H, 4 * H), jnp.float32, -stdv, stdv)
    b_in = jax.random.uniform(ks[3], (4 * H,), jnp.float32, -stdv, stdv)
    b_hid = jax.random.uniform(ks[4], (4 * H,), jnp.float32, -stdv, stdv)
    b_gates = b_in + b_hid        # ii(x)+hi(h) etc. => biases simply add

    # Output Linear(H, O): PyTorch default U(-1/sqrt(H), 1/sqrt(H)).
    bound = 1.0 / math.sqrt(H)
    Wout = jax.random.uniform(ks[5], (H, O), jnp.float32, -bound, bound)
    bout = jax.random.uniform(ks[6], (O,), jnp.float32, -bound, bound)

    return embed_table, Wx, Wh, b_gates, Wout, bout


if __name__ == "__main__":
    key = jax.random.PRNGKey(0)
    vocab_size, embedding_dim, hidden_dim, output_dim = 50, 16, 32, 4
    B, T = 2, 8

    k_tok, k_par = jax.random.split(key)
    # Token ids in [2, vocab); pad id is 1. Second row tail-padded.
    x = jax.random.randint(k_tok, (B, T), 2, vocab_size, dtype=jnp.int32)
    x = x.at[1, 5:].set(1)

    params = init_params(k_par, vocab_size, embedding_dim, hidden_dim,
                         output_dim)

    # time_block=4 -> two time blocks: exercises the scratch carry across the
    # "arbitrary" time axis and the pl.when init/finalize paths.
    logits = lstm_classifier_forward(x, *params, time_block=4)
    jax.block_until_ready(logits)
    assert logits.shape == (B, output_dim)

    ref = _reference_forward(x, *params)
    max_err = float(jnp.max(jnp.abs(logits - ref)))
    assert max_err < 5e-2, f"max abs error vs f32 reference: {max_err}"

    print("KERNEL_OK")
</pallas_src>

<mosaic_0001>
module attributes {stable_mosaic.version = 11 : i64} {
  func.func @lstm_block_kernel(%arg0: i32, %arg1: i32, %arg2: memref<4x8x128xbf16, #tpu.memory_space<vmem>>, %arg3: memref<128x512xbf16, #tpu.memory_space<vmem>>, %arg4: memref<128x512xbf16, #tpu.memory_space<vmem>>, %arg5: memref<1x512xf32, #tpu.memory_space<vmem>>, %arg6: memref<8x1xi32, #tpu.memory_space<vmem>>, %arg7: memref<128x128xbf16, #tpu.memory_space<vmem>>, %arg8: memref<1x128xf32, #tpu.memory_space<vmem>>, %arg9: memref<8x128xf32, #tpu.memory_space<vmem>>, %arg10: memref<8x128xf32, #tpu.memory_space<vmem>>, %arg11: memref<8x128xf32, #tpu.memory_space<vmem>>, %arg12: memref<8x128xf32, #tpu.memory_space<vmem>>) attributes {dimension_semantics = [#tpu.dimension_semantics<parallel>, #tpu.dimension_semantics<arbitrary>], iteration_bounds = array<i64: 1, 2>, scalar_prefetch = 0 : i64, scratch_operands = 3 : i64, tpu.core_type = #tpu.core_type<tc>, window_params = [{transform_indices = @transform_0, window_bounds = array<i64: 4, 8, 128>}, {pipeline_mode = #tpu.pipeline_mode<synchronous>, transform_indices = @transform_1, window_bounds = array<i64: 128, 512>}, {pipeline_mode = #tpu.pipeline_mode<synchronous>, transform_indices = @transform_2, window_bounds = array<i64: 128, 512>}, {pipeline_mode = #tpu.pipeline_mode<synchronous>, transform_indices = @transform_3, window_bounds = array<i64: 1, 512>}, {transform_indices = @transform_4, window_bounds = array<i64: 8, 1>}, {pipeline_mode = #tpu.pipeline_mode<synchronous>, transform_indices = @transform_5, window_bounds = array<i64: 128, 128>}, {pipeline_mode = #tpu.pipeline_mode<synchronous>, transform_indices = @transform_6, window_bounds = array<i64: 1, 128>}, {transform_indices = @transform_7, window_bounds = array<i64: 8, 128>}]} {
    %c0_i32 = arith.constant 0 : i32
    %0 = arith.cmpi eq, %arg1, %c0_i32 : i32
    %1 = arith.extui %0 : i1 to i32
    %c0_i32_0 = arith.constant 0 : i32
    %2 = arith.cmpi ne, %1, %c0_i32_0 : i32
    scf.if %2 {
      %cst_61 = arith.constant 0.000000e+00 : f32
      %150 = vector.broadcast %cst_61 : f32 to vector<8x128xf32>
      %c0_62 = arith.constant 0 : index
      %c0_63 = arith.constant 0 : index
      %151 = vector.load %arg10[%c0_62, %c0_63] : memref<8x128xf32, #tpu.memory_space<vmem>>, vector<8x128xf32>
      tpu.vector_store %arg10[%c0_62, %c0_63], %150 {strides = array<i32>} : memref<8x128xf32, #tpu.memory_space<vmem>>, vector<8x128xf32>,
      %cst_64 = arith.constant 0.000000e+00 : f32
      %152 = vector.broadcast %cst_64 : f32 to vector<8x128xf32>
      %c0_65 = arith.constant 0 : index
      %c0_66 = arith.constant 0 : index
      %153 = vector.load %arg11[%c0_65, %c0_66] : memref<8x128xf32, #tpu.memory_space<vmem>>, vector<8x128xf32>
      tpu.vector_store %arg11[%c0_65, %c0_66], %152 {strides = array<i32>} : memref<8x128xf32, #tpu.memory_space<vmem>>, vector<8x128xf32>,
      %cst_67 = arith.constant 0.000000e+00 : f32
      %154 = vector.broadcast %cst_67 : f32 to vector<8x128xf32>
      %c0_68 = arith.constant 0 : index
      %c0_69 = arith.constant 0 : index
      %155 = vector.load %arg12[%c0_68, %c0_69] : memref<8x128xf32, #tpu.memory_space<vmem>>, vector<8x128xf32>
      tpu.vector_store %arg12[%c0_68, %c0_69], %154 {strides = array<i32>} : memref<8x128xf32, #tpu.memory_space<vmem>>, vector<8x128xf32>,
    } else {
    }
    %c0 = arith.constant 0 : index
    %c0_1 = arith.constant 0 : index
    %3 = vector.load %arg6[%c0, %c0_1] : memref<8x1xi32, #tpu.memory_space<vmem>>, vector<8x1xi32>
    %c4_i32 = arith.constant 4 : i32
    %4 = arith.muli %arg1, %c4_i32 : i32
    %c0_2 = arith.constant 0 : index
    %c0_3 = arith.constant 0 : index
    %5 = vector.load %arg10[%c0_2, %c0_3] : memref<8x128xf32, #tpu.memory_space<vmem>>, vector<8x128xf32>
    %c0_4 = arith.constant 0 : index
    %c0_5 = arith.constant 0 : index
    %6 = vector.load %arg11[%c0_4, %c0_5] : memref<8x128xf32, #tpu.memory_space<vmem>>, vector<8x128xf32>
    %c0_6 = arith.constant 0 : index
    %c0_7 = arith.constant 0 : index
    %7 = vector.load %arg12[%c0_6, %c0_7] : memref<8x128xf32, #tpu.memory_space<vmem>>, vector<8x128xf32>
    %c0_i32_8 = arith.constant 0 : i32
    %8 = arith.index_cast %c0_i32_8 : i32 to index
    %c0_9 = arith.constant 0 : index
    %c0_10 = arith.constant 0 : index
    %9 = vector.load %arg2[%8, %c0_9, %c0_10] : memref<4x8x128xbf16, #tpu.memory_space<vmem>>, vector<1x8x128xbf16>
    %10 = vector.shape_cast %9 : vector<1x8x128xbf16> to vector<8x128xbf16>
    %c0_11 = arith.constant 0 : index
    %c0_12 = arith.constant 0 : index
    %11 = vector.load %arg3[%c0_11, %c0_12] : memref<128x512xbf16, #tpu.memory_space<vmem>>, vector<128x512xbf16>
    %cst = arith.constant dense<0.000000e+00> : vector<8x512xf32>
    %12 = tpu.matmul %10, %11, %cst {dimension_numbers = #tpu.dot_dimension_numbers<[1], [0], [0], [1], [0, 0, 1, 1], [], []>} : vector<8x128xbf16>, vector<128x512xbf16>, vector<8x512xf32> -> vector<8x512xf32>
    %13 = arith.truncf %5 : vector<8x128xf32> to vector<8x128xbf16>
    %c0_13 = arith.constant 0 : index
    %c0_14 = arith.constant 0 : index
    %14 = vector.load %arg4[%c0_13, %c0_14] : memref<128x512xbf16, #tpu.memory_space<vmem>>, vector<128x512xbf16>
    %cst_15 = arith.constant dense<0.000000e+00> : vector<8x512xf32>
    %15 = tpu.matmul %13, %14, %cst_15 {dimension_numbers = #tpu.dot_dimension_numbers<[1], [0], [0], [1], [0, 0, 1, 1], [], []>} : vector<8x128xbf16>, vector<128x512xbf16>, vector<8x512xf32> -> vector<8x512xf32>
    %16 = arith.addf %12, %15 : vector<8x512xf32>
    %c0_16 = arith.constant 0 : index
    %c0_17 = arith.constant 0 : index
    %17 = vector.load %arg5[%c0_16, %c0_17] : memref<1x512xf32, #tpu.memory_space<vmem>>, vector<1x512xf32>
    %18 = vector.broadcast %17 : vector<1x512xf32> to vector<8x512xf32>
    %19 = arith.addf %16, %18 : vector<8x512xf32>
    %20 = vector.extract_strided_slice %19 {offsets = [0, 0], sizes = [8, 384], strides = [1, 1]} : vector<8x512xf32> to vector<8x384xf32>
    %21 = arith.negf %20 : vector<8x384xf32>
    %22 = math.exp %21 : vector<8x384xf32>
    %cst_18 = arith.constant 1.000000e+00 : f32
    %23 = vector.broadcast %cst_18 : f32 to vector<8x384xf32>
    %24 = arith.addf %23, %22 : vector<8x384xf32>
    %25 = arith.divf %23, %24 : vector<8x384xf32>
    %26 = vector.extract_strided_slice %19 {offsets = [0, 384], sizes = [8, 128], strides = [1, 1]} : vector<8x512xf32> to vector<8x128xf32>
    %27 = math.tanh %26 : vector<8x128xf32>
    %28 = vector.extract_strided_slice %25 {offsets = [0, 0], sizes = [8, 128], strides = [1, 1]} : vector<8x384xf32> to vector<8x128xf32>
    %29 = vector.extract_strided_slice %25 {offsets = [0, 128], sizes = [8, 128], strides = [1, 1]} : vector<8x384xf32> to vector<8x128xf32>
    %30 = vector.extract_strided_slice %25 {offsets = [0, 256], sizes = [8, 128], strides = [1, 1]} : vector<8x384xf32> to vector<8x128xf32>
    %31 = arith.mulf %29, %6 : vector<8x128xf32>
    %32 = arith.mulf %27, %28 : vector<8x128xf32>
    %33 = arith.addf %31, %32 : vector<8x128xf32>
    %34 = math.tanh %33 : vector<8x128xf32>
    %35 = arith.mulf %30, %34 : vector<8x128xf32>
    %36 = arith.addi %4, %c0_i32_8 : i32
    %37 = vector.broadcast %36 : i32 to vector<8x1xi32>
    %38 = arith.cmpi eq, %3, %37 : vector<8x1xi32>
    %39 = vector.shape_cast %38 : vector<8x1xi1> to vector<8x1xi1>
    %40 = vector.broadcast %39 : vector<8x1xi1> to vector<8x128xi1>
    %41 = arith.select %40, %35, %7 : vector<8x128xi1>, vector<8x128xf32>
    %c1_i32 = arith.constant 1 : i32
    %42 = arith.index_cast %c1_i32 : i32 to index
    %c0_19 = arith.constant 0 : index
    %c0_20 = arith.constant 0 : index
    %43 = vector.load %arg2[%42, %c0_19, %c0_20] : memref<4x8x128xbf16, #tpu.memory_space<vmem>>, vector<1x8x128xbf16>
    %44 = vector.shape_cast %43 : vector<1x8x128xbf16> to vector<8x128xbf16>
    %c0_21 = arith.constant 0 : index
    %c0_22 = arith.constant 0 : index
    %45 = vector.load %arg3[%c0_21, %c0_22] : memref<128x512xbf16, #tpu.memory_space<vmem>>, vector<128x512xbf16>
    %cst_23 = arith.constant dense<0.000000e+00> : vector<8x512xf32>
    %46 = tpu.matmul %44, %45, %cst_23 {dimension_numbers = #tpu.dot_dimension_numbers<[1], [0], [0], [1], [0, 0, 1, 1], [], []>} : vector<8x128xbf16>, vector<128x512xbf16>, vector<8x512xf32> -> vector<8x512xf32>
    %47 = arith.truncf %35 : vector<8x128xf32> to vector<8x128xbf16>
    %c0_24 = arith.constant 0 : index
    %c0_25 = arith.constant 0 : index
    %48 = vector.load %arg4[%c0_24, %c0_25] : memref<128x512xbf16, #tpu.memory_space<vmem>>, vector<128x512xbf16>
    %cst_26 = arith.constant dense<0.000000e+00> : vector<8x512xf32>
    %49 = tpu.matmul %47, %48, %cst_26 {dimension_numbers = #tpu.dot_dimension_numbers<[1], [0], [0], [1], [0, 0, 1, 1], [], []>} : vector<8x128xbf16>, vector<128x512xbf16>, vector<8x512xf32> -> vector<8x512xf32>
    %50 = arith.addf %46, %49 : vector<8x512xf32>
    %c0_27 = arith.constant 0 : index
    %c0_28 = arith.constant 0 : index
    %51 = vector.load %arg5[%c0_27, %c0_28] : memref<1x512xf32, #tpu.memory_space<vmem>>, vector<1x512xf32>
    %52 = vector.broadcast %51 : vector<1x512xf32> to vector<8x512xf32>
    %53 = arith.addf %50, %52 : vector<8x512xf32>
    %54 = vector.extract_strided_slice %53 {offsets = [0, 0], sizes = [8, 384], strides = [1, 1]} : vector<8x512xf32> to vector<8x384xf32>
    %55 = arith.negf %54 : vector<8x384xf32>
    %56 = math.exp %55 : vector<8x384xf32>
    %cst_29 = arith.constant 1.000000e+00 : f32
    %57 = vector.broadcast %cst_29 : f32 to vector<8x384xf32>
    %58 = arith.addf %57, %56 : vector<8x384xf32>
    %59 = arith.divf %57, %58 : vector<8x384xf32>
    %60 = vector.extract_strided_slice %53 {offsets = [0, 384], sizes = [8, 128], strides = [1, 1]} : vector<8x512xf32> to vector<8x128xf32>
    %61 = math.tanh %60 : vector<8x128xf32>
    %62 = vector.extract_strided_slice %59 {offsets = [0, 0], sizes = [8, 128], strides = [1, 1]} : vector<8x384xf32> to vector<8x128xf32>
    %63 = vector.extract_strided_slice %59 {offsets = [0, 128], sizes = [8, 128], strides = [1, 1]} : vector<8x384xf32> to vector<8x128xf32>
    %64 = vector.extract_strided_slice %59 {offsets = [0, 256], sizes = [8, 128], strides = [1, 1]} : vector<8x384xf32> to vector<8x128xf32>
    %65 = arith.mulf %63, %33 : vector<8x128xf32>
    %66 = arith.mulf %61, %62 : vector<8x128xf32>
    %67 = arith.addf %65, %66 : vector<8x128xf32>
    %68 = math.tanh %67 : vector<8x128xf32>
    %69 = arith.mulf %64, %68 : vector<8x128xf32>
    %70 = arith.addi %4, %c1_i32 : i32
    %71 = vector.broadcast %70 : i32 to vector<8x1xi32>
    %72 = arith.cmpi eq, %3, %71 : vector<8x1xi32>
    %73 = vector.shape_cast %72 : vector<8x1xi1> to vector<8x1xi1>
    %74 = vector.broadcast %73 : vector<8x1xi1> to vector<8x128xi1>
    %75 = arith.select %74, %69, %41 : vector<8x128xi1>, vector<8x128xf32>
    %c2_i32 = arith.constant 2 : i32
    %76 = arith.index_cast %c2_i32 : i32 to index
    %c0_30 = arith.constant 0 : index
    %c0_31 = arith.constant 0 : index
    %77 = vector.load %arg2[%76, %c0_30, %c0_31] : memref<4x8x128xbf16, #tpu.memory_space<vmem>>, vector<1x8x128xbf16>
    %78 = vector.shape_cast %77 : vector<1x8x128xbf16> to vector<8x128xbf16>
    %c0_32 = arith.constant 0 : index
    %c0_33 = arith.constant 0 : index
    %79 = vector.load %arg3[%c0_32, %c0_33] : memref<128x512xbf16, #tpu.memory_space<vmem>>, vector<128x512xbf16>
    %cst_34 = arith.constant dense<0.000000e+00> : vector<8x512xf32>
    %80 = tpu.matmul %78, %79, %cst_34 {dimension_numbers = #tpu.dot_dimension_numbers<[1], [0], [0], [1], [0, 0, 1, 1], [], []>} : vector<8x128xbf16>, vector<128x512xbf16>, vector<8x512xf32> -> vector<8x512xf32>
    %81 = arith.truncf %69 : vector<8x128xf32> to vector<8x128xbf16>
    %c0_35 = arith.constant 0 : index
    %c0_36 = arith.constant 0 : index
    %82 = vector.load %arg4[%c0_35, %c0_36] : memref<128x512xbf16, #tpu.memory_space<vmem>>, vector<128x512xbf16>
    %cst_37 = arith.constant dense<0.000000e+00> : vector<8x512xf32>
    %83 = tpu.matmul %81, %82, %cst_37 {dimension_numbers = #tpu.dot_dimension_numbers<[1], [0], [0], [1], [0, 0, 1, 1], [], []>} : vector<8x128xbf16>, vector<128x512xbf16>, vector<8x512xf32> -> vector<8x512xf32>
    %84 = arith.addf %80, %83 : vector<8x512xf32>
    %c0_38 = arith.constant 0 : index
    %c0_39 = arith.constant 0 : index
    %85 = vector.load %arg5[%c0_38, %c0_39] : memref<1x512xf32, #tpu.memory_space<vmem>>, vector<1x512xf32>
    %86 = vector.broadcast %85 : vector<1x512xf32> to vector<8x512xf32>
    %87 = arith.addf %84, %86 : vector<8x512xf32>
    %88 = vector.extract_strided_slice %87 {offsets = [0, 0], sizes = [8, 384], strides = [1, 1]} : vector<8x512xf32> to vector<8x384xf32>
    %89 = arith.negf %88 : vector<8x384xf32>
    %90 = math.exp %89 : vector<8x384xf32>
    %cst_40 = arith.constant 1.000000e+00 : f32
    %91 = vector.broadcast %cst_40 : f32 to vector<8x384xf32>
    %92 = arith.addf %91, %90 : vector<8x384xf32>
    %93 = arith.divf %91, %92 : vector<8x384xf32>
    %94 = vector.extract_strided_slice %87 {offsets = [0, 384], sizes = [8, 128], strides = [1, 1]} : vector<8x512xf32> to vector<8x128xf32>
    %95 = math.tanh %94 : vector<8x128xf32>
    %96 = vector.extract_strided_slice %93 {offsets = [0, 0], sizes = [8, 128], strides = [1, 1]} : vector<8x384xf32> to vector<8x128xf32>
    %97 = vector.extract_strided_slice %93 {offsets = [0, 128], sizes = [8, 128], strides = [1, 1]} : vector<8x384xf32> to vector<8x128xf32>
    %98 = vector.extract_strided_slice %93 {offsets = [0, 256], sizes = [8, 128], strides = [1, 1]} : vector<8x384xf32> to vector<8x128xf32>
    %99 = arith.mulf %97, %67 : vector<8x128xf32>
    %100 = arith.mulf %95, %96 : vector<8x128xf32>
    %101 = arith.addf %99, %100 : vector<8x128xf32>
    %102 = math.tanh %101 : vector<8x128xf32>
    %103 = arith.mulf %98, %102 : vector<8x128xf32>
    %104 = arith.addi %4, %c2_i32 : i32
    %105 = vector.broadcast %104 : i32 to vector<8x1xi32>
    %106 = arith.cmpi eq, %3, %105 : vector<8x1xi32>
    %107 = vector.shape_cast %106 : vector<8x1xi1> to vector<8x1xi1>
    %108 = vector.broadcast %107 : vector<8x1xi1> to vector<8x128xi1>
    %109 = arith.select %108, %103, %75 : vector<8x128xi1>, vector<8x128xf32>
    %c3_i32 = arith.constant 3 : i32
    %110 = arith.index_cast %c3_i32 : i32 to index
    %c0_41 = arith.constant 0 : index
    %c0_42 = arith.constant 0 : index
    %111 = vector.load %arg2[%110, %c0_41, %c0_42] : memref<4x8x128xbf16, #tpu.memory_space<vmem>>, vector<1x8x128xbf16>
    %112 = vector.shape_cast %111 : vector<1x8x128xbf16> to vector<8x128xbf16>
    %c0_43 = arith.constant 0 : index
    %c0_44 = arith.constant 0 : index
    %113 = vector.load %arg3[%c0_43, %c0_44] : memref<128x512xbf16, #tpu.memory_space<vmem>>, vector<128x512xbf16>
    %cst_45 = arith.constant dense<0.000000e+00> : vector<8x512xf32>
    %114 = tpu.matmul %112, %113, %cst_45 {dimension_numbers = #tpu.dot_dimension_numbers<[1], [0], [0], [1], [0, 0, 1, 1], [], []>} : vector<8x128xbf16>, vector<128x512xbf16>, vector<8x512xf32> -> vector<8x512xf32>
    %115 = arith.truncf %103 : vector<8x128xf32> to vector<8x128xbf16>
    %c0_46 = arith.constant 0 : index
    %c0_47 = arith.constant 0 : index
    %116 = vector.load %arg4[%c0_46, %c0_47] : memref<128x512xbf16, #tpu.memory_space<vmem>>, vector<128x512xbf16>
    %cst_48 = arith.constant dense<0.000000e+00> : vector<8x512xf32>
    %117 = tpu.matmul %115, %116, %cst_48 {dimension_numbers = #tpu.dot_dimension_numbers<[1], [0], [0], [1], [0, 0, 1, 1], [], []>} : vector<8x128xbf16>, vector<128x512xbf16>, vector<8x512xf32> -> vector<8x512xf32>
    %118 = arith.addf %114, %117 : vector<8x512xf32>
    %c0_49 = arith.constant 0 : index
    %c0_50 = arith.constant 0 : index
    %119 = vector.load %arg5[%c0_49, %c0_50] : memref<1x512xf32, #tpu.memory_space<vmem>>, vector<1x512xf32>
    %120 = vector.broadcast %119 : vector<1x512xf32> to vector<8x512xf32>
    %121 = arith.addf %118, %120 : vector<8x512xf32>
    %122 = vector.extract_strided_slice %121 {offsets = [0, 0], sizes = [8, 384], strides = [1, 1]} : vector<8x512xf32> to vector<8x384xf32>
    %123 = arith.negf %122 : vector<8x384xf32>
    %124 = math.exp %123 : vector<8x384xf32>
    %cst_51 = arith.constant 1.000000e+00 : f32
    %125 = vector.broadcast %cst_51 : f32 to vector<8x384xf32>
    %126 = arith.addf %125, %124 : vector<8x384xf32>
    %127 = arith.divf %125, %126 : vector<8x384xf32>
    %128 = vector.extract_strided_slice %121 {offsets = [0, 384], sizes = [8, 128], strides = [1, 1]} : vector<8x512xf32> to vector<8x128xf32>
    %129 = math.tanh %128 : vector<8x128xf32>
    %130 = vector.extract_strided_slice %127 {offsets = [0, 0], sizes = [8, 128], strides = [1, 1]} : vector<8x384xf32> to vector<8x128xf32>
    %131 = vector.extract_strided_slice %127 {offsets = [0, 128], sizes = [8, 128], strides = [1, 1]} : vector<8x384xf32> to vector<8x128xf32>
    %132 = vector.extract_strided_slice %127 {offsets = [0, 256], sizes = [8, 128], strides = [1, 1]} : vector<8x384xf32> to vector<8x128xf32>
    %133 = arith.mulf %131, %101 : vector<8x128xf32>
    %134 = arith.mulf %129, %130 : vector<8x128xf32>
    %135 = arith.addf %133, %134 : vector<8x128xf32>
    %136 = math.tanh %135 : vector<8x128xf32>
    %137 = arith.mulf %132, %136 : vector<8x128xf32>
    %138 = arith.addi %4, %c3_i32 : i32
    %139 = vector.broadcast %138 : i32 to vector<8x1xi32>
    %140 = arith.cmpi eq, %3, %139 : vector<8x1xi32>
    %141 = vector.shape_cast %140 : vector<8x1xi1> to vector<8x1xi1>
    %142 = vector.broadcast %141 : vector<8x1xi1> to vector<8x128xi1>
    %143 = arith.select %142, %137, %109 : vector<8x128xi1>, vector<8x128xf32>
    %c4_i32_52 = arith.constant 4 : i32
    %c0_53 = arith.constant 0 : index
    %c0_54 = arith.constant 0 : index
    %144 = vector.load %arg10[%c0_53, %c0_54] : memref<8x128xf32, #tpu.memory_space<vmem>>, vector<8x128xf32>
    tpu.vector_store %arg10[%c0_53, %c0_54], %137 {strides = array<i32>} : memref<8x128xf32, #tpu.memory_space<vmem>>, vector<8x128xf32>,
    %c0_55 = arith.constant 0 : index
    %c0_56 = arith.constant 0 : index
    %145 = vector.load %arg11[%c0_55, %c0_56] : memref<8x128xf32, #tpu.memory_space<vmem>>, vector<8x128xf32>
    tpu.vector_store %arg11[%c0_55, %c0_56], %135 {strides = array<i32>} : memref<8x128xf32, #tpu.memory_space<vmem>>, vector<8x128xf32>,
    %c0_57 = arith.constant 0 : index
    %c0_58 = arith.constant 0 : index
    %146 = vector.load %arg12[%c0_57, %c0_58] : memref<8x128xf32, #tpu.memory_space<vmem>>, vector<8x128xf32>
    tpu.vector_store %arg12[%c0_57, %c0_58], %143 {strides = array<i32>} : memref<8x128xf32, #tpu.memory_space<vmem>>, vector<8x128xf32>,
    %c1_i32_59 = arith.constant 1 : i32
    %147 = arith.cmpi eq, %arg1, %c1_i32_59 : i32
    %148 = arith.extui %147 : i1 to i32
    %c0_i32_60 = arith.constant 0 : i32
    %149 = arith.cmpi ne, %148, %c0_i32_60 : i32
    scf.if %149 {
      %150 = arith.truncf %143 : vector<8x128xf32> to vector<8x128xbf16>
      %c0_61 = arith.constant 0 : index
      %c0_62 = arith.constant 0 : index
      %151 = vector.load %arg7[%c0_61, %c0_62] : memref<128x128xbf16, #tpu.memory_space<vmem>>, vector<128x128xbf16>
      %cst_63 = arith.constant dense<0.000000e+00> : vector<8x128xf32>
      %152 = tpu.matmul %150, %151, %cst_63 {dimension_numbers = #tpu.dot_dimension_numbers<[1], [0], [0], [1], [0, 0, 1, 1], [], []>} : vector<8x128xbf16>, vector<128x128xbf16>, vector<8x128xf32> -> vector<8x128xf32>
      %c0_64 = arith.constant 0 : index
      %c0_65 = arith.constant 0 : index
      %153 = vector.load %arg8[%c0_64, %c0_65] : memref<1x128xf32, #tpu.memory_space<vmem>>, vector<1x128xf32>
      %154 = vector.broadcast %153 : vector<1x128xf32> to vector<8x128xf32>
      %155 = arith.addf %152, %154 : vector<8x128xf32>
      %c0_66 = arith.constant 0 : index
      %c0_67 = arith.constant 0 : index
      %156 = vector.load %arg9[%c0_66, %c0_67] : memref<8x128xf32, #tpu.memory_space<vmem>>, vector<8x128xf32>
      tpu.vector_store %arg9[%c0_66, %c0_67], %155 {strides = array<i32>} : memref<8x128xf32, #tpu.memory_space<vmem>>, vector<8x128xf32>,
    } else {
    }
    return
  }
  func.func @transform_0(%arg0: i32, %arg1: i32) -> (i32, i32, i32) {
    %c0_i32 = arith.constant 0 : i32
    %c0_i32_0 = arith.constant 0 : i32
    return %arg1, %arg0, %c0_i32 : i32, i32, i32
  }
  func.func @transform_1(%arg0: i32, %arg1: i32) -> (i32, i32) {
    %c0_i32 = arith.constant 0 : i32
    %c0_i32_0 = arith.constant 0 : i32
    %c0_i32_1 = arith.constant 0 : i32
    return %c0_i32, %c0_i32_0 : i32, i32
  }
  func.func @transform_2(%arg0: i32, %arg1: i32) -> (i32, i32) {
    %c0_i32 = arith.constant 0 : i32
    %c0_i32_0 = arith.constant 0 : i32
    %c0_i32_1 = arith.constant 0 : i32
    return %c0_i32, %c0_i32_0 : i32, i32
  }
  func.func @transform_3(%arg0: i32, %arg1: i32) -> (i32, i32) {
    %c0_i32 = arith.constant 0 : i32
    %c0_i32_0 = arith.constant 0 : i32
    %c0_i32_1 = arith.constant 0 : i32
    return %c0_i32, %c0_i32_0 : i32, i32
  }
  func.func @transform_4(%arg0: i32, %arg1: i32) -> (i32, i32) {
    %c0_i32 = arith.constant 0 : i32
    %c0_i32_0 = arith.constant 0 : i32
    return %arg0, %c0_i32 : i32, i32
  }
  func.func @transform_5(%arg0: i32, %arg1: i32) -> (i32, i32) {
    %c0_i32 = arith.constant 0 : i32
    %c0_i32_0 = arith.constant 0 : i32
    %c0_i32_1 = arith.constant 0 : i32
    return %c0_i32, %c0_i32_0 : i32, i32
  }
  func.func @transform_6(%arg0: i32, %arg1: i32) -> (i32, i32) {
    %c0_i32 = arith.constant 0 : i32
    %c0_i32_0 = arith.constant 0 : i32
    %c0_i32_1 = arith.constant 0 : i32
    return %c0_i32, %c0_i32_0 : i32, i32
  }
  func.func @transform_7(%arg0: i32, %arg1: i32) -> (i32, i32) {
    %c0_i32 = arith.constant 0 : i32
    %c0_i32_0 = arith.constant 0 : i32
    return %arg0, %c0_i32 : i32, i32
  }
}

</mosaic_0001>

<llo_original>
// kernel: tpu_custom_call.1
$region0: #{tpu_custom_call.1}
  #allocation0 [shape = 'u32[]', space=smem, size = 0x4, offset = 0x4, fixed_abs, tag = 'smem constant byte address 0x4 - core index']
  #allocation1 [shape = 'u32[144,128]{1,0:T(1,128)}', space=vmem, size = 0x12000, scoped, tag = 'internal scratch']
  #allocation2 [shape = 'f32[8,128]{1,0:T(8,128)}', space=vmem, size = 0x1000, scoped, tag = 'scratch operand']
  #allocation3 [shape = 'f32[8,128]{1,0:T(8,128)}', space=vmem, size = 0x1000, scoped, tag = 'scratch operand']
  #allocation4 [shape = 'f32[8,128]{1,0:T(8,128)}', space=vmem, size = 0x1000, scoped, tag = 'scratch operand']
  %s0 = inlined_call_operand.hbm [shape: bf16[8,8,128], index: 0, kind: input, shape index: {}]
  %s1 = inlined_call_operand.hbm [shape: bf16[128,512], index: 1, kind: input, shape index: {}]
  %s2 = inlined_call_operand.hbm [shape: bf16[128,512], index: 2, kind: input, shape index: {}]
  %s3 = inlined_call_operand.vmem [shape: f32[1,512], index: 3, kind: input, shape index: {}]
  %s4 = inlined_call_operand.vmem [shape: s32[8,1], index: 4, kind: input, shape index: {}]
  %s5 = inlined_call_operand.hbm [shape: bf16[128,128], index: 5, kind: input, shape index: {}]
  %s6 = inlined_call_operand.vmem [shape: f32[1,128], index: 6, kind: input, shape index: {}]
  %s7 = inlined_call_operand.hbm [shape: f32[8,128], index: 7, kind: output, shape index: {}]
  %s8 = sld [smem:[#allocation0]]
  $region85: #{tpu_custom_call.1} parent=0
    _
  %s10 = ssub.s32 1, %s8
  %s11 = scalar_select 0, %s10, %s8
  $region1: #{tpu_custom_call.1} parent=0
    #allocation5 [shape = 'u8[16384]{0}', space=vmem, size = 0x4000, scoped, tag = 'input window, operand 0']
    #allocation6 [shape = 's32[2]{0}', space=sflag, size = 0x8, scoped, tag = 'scoped memory for tpu_custom_call.1']
    #allocation7 [shape = 's32[2]{0}', space=sflag, size = 0x8, scoped, tag = 'scoped memory for tpu_custom_call.1']
    #allocation8 [shape = 'u8[131072]{0}', space=vmem, size = 0x20000, scoped, tag = 'input window, operand 1, single buffered']
    #allocation9 [shape = 's32[1]{0}', space=sflag, size = 0x4, scoped, tag = 'scoped memory for tpu_custom_call.1']
    #allocation10 [shape = 'u8[131072]{0}', space=vmem, size = 0x20000, scoped, tag = 'input window, operand 2, single buffered']
    #allocation11 [shape = 'u8[32768]{0}', space=vmem, size = 0x8000, scoped, tag = 'input window, operand 5, single buffered']
    #allocation12 [shape = 's32[1]{0}', space=sflag, size = 0x4, scoped, tag = 'scoped memory for tpu_custom_call.1']
    #allocation13 [shape = 'u8[4096]{0}', space=vmem, size = 0x1000, scoped, tag = 'output window, operand 0, single buffered']
    %12 = vsyncpa [#allocation6], 0
    %s13 = scalar_lea.sflag [#allocation6], 1
    %14 = vsyncpa %s13, 0
    %15 = vsyncpa [#allocation9], 0
    %16 = vsyncpa [#allocation12], 0
    %17 = vsyncpa [#allocation7], 0
    loop: start=0, step=1, limit=4
    $region2: #{tpu_custom_call.1} parent=1 // loop_pre_header
      _
    $region3: #{tpu_custom_call.1} parent=1 // loop_header
      %s19 = sphi 0, %s23
      %p20 = scmp.ge.s32.totalorder %s19, 4
      %s26 = sphi 0, %s38
      %s27 = sphi 0, %s34
      %s28 = sphi 0, %s26
      %s29 = sphi 0, %s27
      %s30 = sphi 0, %s28
      %s31 = sphi 0, %s29
      %s43 = sphi 0, %s45
      %s46 = sphi 0, %s43
      %s47 = sphi 0, %s46
      %s63 = sphi 0, %s47
      %s67 = sphi 0, %s67
      %s69 = sphi 0, %s67
      %s70 = sphi 0, %s69
      %s84 = sphi 0, %s70
      %s88 = sphi 0, %s88
      %s90 = sphi 0, %s88
      %s91 = sphi 0, %s90
      %s105 = sphi 0, %s91
      %s109 = sphi 0, %s109
      %s111 = sphi 0, %s109
      %s112 = sphi 0, %s111
      %s126 = sphi 0, %s112
      %s132 = sphi 0, %s134
      %s135 = sphi 0, %s132
      %s136 = sphi 0, %s135
      %s152 = sphi 0, %s136
      %s156 = sphi 0, %s156
      %s158 = sphi 0, %s156
      %s159 = sphi 0, %s158
      %s173 = sphi 0, %s159
      %s177 = sphi 0, %s177
      %s179 = sphi 0, %s177
      %s180 = sphi 0, %s179
      %s194 = sphi 0, %s180
      %s200 = sphi 0, %s202
      %s203 = sphi 0, %s200
      %s204 = sphi 0, %s203
      %s220 = sphi 0, %s204
    $region4: #{tpu_custom_call.1} parent=1 // loop_header_branch
      %22 = sbr.rel (%p20) target = $region8
    $region5: #{tpu_custom_call.1} parent=1 // loop_body
      %s24 = ssub.s32 %s19, 1
      %s25 = ssub.s32 %s19, 2
      %s32 = sadd.s32 1, %s27
      %p33 = scmp.ge.s32.totalorder %s32, 2
      %s34 = scalar_select %p33, 0, %s32
      %s35 = sadd.s32 1, %s26
      %s36 = scalar_select %p33, %s35, %s26
      %p37 = scmp.ge.s32.totalorder %s36, 1
      %s38 = scalar_select %p37, 0, %s36
      %s39 = ssub.s32 %s27, %s34
      %s40 = ssub.s32 %s26, %s38
      %s41 = sor.u32 %s39, %s40
      %p42 = scmp.eq.s32.totalorder %s41, 0
      %s44 = sadd.s32 %s43, 1
      %s45 = scalar_select %p42, %s43, %s44
      %p48 = pneg %p42
      %p49 = scmp.eq.s32.totalorder %s19, 1
      %p50 = por %p48, %p49
      %p51 = scmp.ne.s32.totalorder %s43, %s46
      %p52 = scmp.eq.s32.totalorder %s19, 0
      %p53 = por %p51, %p52
      %p54 = scmp.ne.s32.totalorder %s43, %s46
      %p55 = scmp.eq.s32.totalorder %s24, 1
      %p56 = por %p54, %p55
      %p57 = scmp.ne.s32.totalorder %s46, %s47
      %p58 = scmp.eq.s32.totalorder %s24, 0
      %p59 = por %p57, %p58
      %p60 = scmp.ne.s32.totalorder %s46, %s47
      %p61 = scmp.eq.s32.totalorder %s25, 1
      %p62 = por %p60, %p61
      %p64 = scmp.ne.s32.totalorder %s47, %s63
      %p65 = scmp.eq.s32.totalorder %s25, 0
      %p66 = por %p64, %p65
      %s68 = sadd.s32 %s67, 1
      %p71 = scmp.eq.s32.totalorder %s19, 1
      %p72 = scmp.ne.s32.totalorder %s67, %s69
      %p73 = scmp.eq.s32.totalorder %s19, 0
      %p74 = por %p72, %p73
      %p75 = scmp.ne.s32.totalorder %s67, %s69
      %p76 = scmp.eq.s32.totalorder %s24, 1
      %p77 = por %p75, %p76
      %p78 = scmp.ne.s32.totalorder %s69, %s70
      %p79 = scmp.eq.s32.totalorder %s24, 0
      %p80 = por %p78, %p79
      %p81 = scmp.ne.s32.totalorder %s69, %s70
      %p82 = scmp.eq.s32.totalorder %s25, 1
      %p83 = por %p81, %p82
      %p85 = scmp.ne.s32.totalorder %s70, %s84
      %p86 = scmp.eq.s32.totalorder %s25, 0
      %p87 = por %p85, %p86
      %s89 = sadd.s32 %s88, 1
      %p92 = scmp.eq.s32.totalorder %s19, 1
      %p93 = scmp.ne.s32.totalorder %s88, %s90
      %p94 = scmp.eq.s32.totalorder %s19, 0
      %p95 = por %p93, %p94
      %p96 = scmp.ne.s32.totalorder %s88, %s90
      %p97 = scmp.eq.s32.totalorder %s24, 1
      %p98 = por %p96, %p97
      %p99 = scmp.ne.s32.totalorder %s90, %s91
      %p100 = scmp.eq.s32.totalorder %s24, 0
      %p101 = por %p99, %p100
      %p102 = scmp.ne.s32.totalorder %s90, %s91
      %p103 = scmp.eq.s32.totalorder %s25, 1
      %p104 = por %p102, %p103
      %p106 = scmp.ne.s32.totalorder %s91, %s105
      %p107 = scmp.eq.s32.totalorder %s25, 0
      %p108 = por %p106, %p107
      %s110 = sadd.s32 %s109, 1
      %p113 = scmp.eq.s32.totalorder %s19, 1
      %p114 = scmp.ne.s32.totalorder %s109, %s111
      %p115 = scmp.eq.s32.totalorder %s19, 0
      %p116 = por %p114, %p115
      %p117 = scmp.ne.s32.totalorder %s109, %s111
      %p118 = scmp.eq.s32.totalorder %s24, 1
      %p119 = por %p117, %p118
      %p120 = scmp.ne.s32.totalorder %s111, %s112
      %p121 = scmp.eq.s32.totalorder %s24, 0
      %p122 = por %p120, %p121
      %p123 = scmp.ne.s32.totalorder %s111, %s112
      %p124 = scmp.eq.s32.totalorder %s25, 1
      %p125 = por %p123, %p124
      %p127 = scmp.ne.s32.totalorder %s112, %s126
      %p128 = scmp.eq.s32.totalorder %s25, 0
      %p129 = por %p127, %p128
      %s130 = ssub.s32 %s26, %s38
      %p131 = scmp.eq.s32.totalorder %s130, 0
      %s133 = sadd.s32 %s132, 1
      %s134 = scalar_select %p131, %s132, %s133
      %p137 = pneg %p131
      %p138 = scmp.eq.s32.totalorder %s19, 1
      %p139 = por %p137, %p138
      %p140 = scmp.ne.s32.totalorder %s132, %s135
      %p141 = scmp.eq.s32.totalorder %s19, 0
      %p142 = por %p140, %p141
      %p143 = scmp.ne.s32.totalorder %s132, %s135
      %p144 = scmp.eq.s32.totalorder %s24, 1
      %p145 = por %p143, %p144
      %p146 = scmp.ne.s32.totalorder %s135, %s136
      %p147 = scmp.eq.s32.totalorder %s24, 0
      %p148 = por %p146, %p147
      %p149 = scmp.ne.s32.totalorder %s135, %s136
      %p150 = scmp.eq.s32.totalorder %s25, 1
      %p151 = por %p149, %p150
      %p153 = scmp.ne.s32.totalorder %s136, %s152
      %p154 = scmp.eq.s32.totalorder %s25, 0
      %p155 = por %p153, %p154
      %s157 = sadd.s32 %s156, 1
      %p160 = scmp.eq.s32.totalorder %s19, 1
      %p161 = scmp.ne.s32.totalorder %s156, %s158
      %p162 = scmp.eq.s32.totalorder %s19, 0
      %p163 = por %p161, %p162
      %p164 = scmp.ne.s32.totalorder %s156, %s158
      %p165 = scmp.eq.s32.totalorder %s24, 1
      %p166 = por %p164, %p165
      %p167 = scmp.ne.s32.totalorder %s158, %s159
      %p168 = scmp.eq.s32.totalorder %s24, 0
      %p169 = por %p167, %p168
      %p170 = scmp.ne.s32.totalorder %s158, %s159
      %p171 = scmp.eq.s32.totalorder %s25, 1
      %p172 = por %p170, %p171
      %p174 = scmp.ne.s32.totalorder %s159, %s173
      %p175 = scmp.eq.s32.totalorder %s25, 0
      %p176 = por %p174, %p175
      %s178 = sadd.s32 %s177, 1
      %p181 = scmp.eq.s32.totalorder %s19, 1
      %p182 = scmp.ne.s32.totalorder %s177, %s179
      %p183 = scmp.eq.s32.totalorder %s19, 0
      %p184 = por %p182, %p183
      %p185 = scmp.ne.s32.totalorder %s177, %s179
      %p186 = scmp.eq.s32.totalorder %s24, 1
      %p187 = por %p185, %p186
      %p188 = scmp.ne.s32.totalorder %s179, %s180
      %p189 = scmp.eq.s32.totalorder %s24, 0
      %p190 = por %p188, %p189
      %p191 = scmp.ne.s32.totalorder %s179, %s180
      %p192 = scmp.eq.s32.totalorder %s25, 1
      %p193 = por %p191, %p192
      %p195 = scmp.ne.s32.totalorder %s180, %s194
      %p196 = scmp.eq.s32.totalorder %s25, 0
      %p197 = por %p195, %p196
      %s198 = ssub.s32 %s26, %s38
      %p199 = scmp.eq.s32.totalorder %s198, 0
      %s201 = sadd.s32 %s200, 1
      %s202 = scalar_select %p199, %s200, %s201
      %p205 = pneg %p199
      %p206 = scmp.eq.s32.totalorder %s19, 1
      %p207 = por %p205, %p206
      %p208 = scmp.ne.s32.totalorder %s200, %s203
      %p209 = scmp.eq.s32.totalorder %s19, 0
      %p210 = por %p208, %p209
      %p211 = scmp.ne.s32.totalorder %s200, %s203
      %p212 = scmp.eq.s32.totalorder %s24, 1
      %p213 = por %p211, %p212
      %p214 = scmp.ne.s32.totalorder %s203, %s204
      %p215 = scmp.eq.s32.totalorder %s24, 0
      %p216 = por %p214, %p215
      %p217 = scmp.ne.s32.totalorder %s203, %s204
      %p218 = scmp.eq.s32.totalorder %s25, 1
      %p219 = por %p217, %p218
      %p221 = scmp.ne.s32.totalorder %s204, %s220
      %p222 = scmp.eq.s32.totalorder %s25, 0
      %p223 = por %p221, %p222
      %p224 = scmp.le.s32.totalorder 1, %s19
      %p225 = scmp.lt.s32.totalorder %s19, 3
      %p226 = pnand %p224, %p225
      %p227 = pneg %p226
      // Predicated region
      $region9: #{tpu_custom_call.1} parent=5 // pred_check
        _
      $region10: #{tpu_custom_call.1} parent=5 // pred_check_branch
        %229 = sbr.rel (%p226) target = $region12
      $region11: #{tpu_custom_call.1} parent=5 // pred_region
        %s230 = ssub.s32 %s19, 1
        // Predicated region
        $region13: #{tpu_custom_call.1} parent=11 // pred_check
          %p231 = pneg %p80
        $region14: #{tpu_custom_call.1} parent=11 // pred_check_branch
          %233 = sbr.rel (%p231) target = $region16
        $region15: #{tpu_custom_call.1} parent=11 // pred_region
          %s235 = ssub.s32 4096, 4096
          %236 = vsyncadd [#allocation9], %s235
          %s237 = sshll.u32 [#allocation8], 4
          %s238 = int_to_ptr.vmem [resolvable:$true] %s237
          %243 = dma.hbm_to_vmem [thread:$0]  %s1, 4096, %s238, [#allocation9], 256, 256, 16
        $region16: #{tpu_custom_call.1} parent=11 // pred_fallthru
          _
        // Predicated region
        $region17: #{tpu_custom_call.1} parent=11 // pred_check
          %p244 = pneg %p101
        $region18: #{tpu_custom_call.1} parent=11 // pred_check_branch
          %246 = sbr.rel (%p244) target = $region20
        $region19: #{tpu_custom_call.1} parent=11 // pred_region
          %s248 = ssub.s32 4096, 4096
          %249 = vsyncadd [#allocation9], %s248
          %s250 = sshll.u32 [#allocation10], 4
          %s251 = int_to_ptr.vmem [resolvable:$true] %s250
          %256 = dma.hbm_to_vmem [thread:$0]  %s2, 4096, %s251, [#allocation9], 256, 256, 16
        $region20: #{tpu_custom_call.1} parent=11 // pred_fallthru
          _
        // Predicated region
        $region21: #{tpu_custom_call.1} parent=11 // pred_check
          %p257 = pneg %p122
        $region22: #{tpu_custom_call.1} parent=11 // pred_check_branch
          %259 = sbr.rel (%p257) target = $region24
        $region23: #{tpu_custom_call.1} parent=11 // pred_region
          _
        $region24: #{tpu_custom_call.1} parent=11 // pred_fallthru
          _
        // Predicated region
        $region25: #{tpu_custom_call.1} parent=11 // pred_check
          %p260 = pneg %p148
        $region26: #{tpu_custom_call.1} parent=11 // pred_check_branch
          %262 = sbr.rel (%p260) target = $region28
        $region27: #{tpu_custom_call.1} parent=11 // pred_region
          %p263 = scmp.lt.s32.totalorder %s28, 0
          %s264 = scalar_select %p263, %s28, 0
          %s265 = smul.addr %s264, 8
          %s266 = scalar_lea.vmem %s4, %s265
        $region28: #{tpu_custom_call.1} parent=11 // pred_fallthru
          _
        // Predicated region
        $region29: #{tpu_custom_call.1} parent=11 // pred_check
          %p267 = pneg %p169
        $region30: #{tpu_custom_call.1} parent=11 // pred_check_branch
          %269 = sbr.rel (%p267) target = $region32
        $region31: #{tpu_custom_call.1} parent=11 // pred_region
          %s271 = ssub.s32 1024, 1024
          %272 = vsyncadd [#allocation12], %s271
          %s273 = sshll.u32 [#allocation11], 4
          %s274 = int_to_ptr.vmem [resolvable:$true] %s273
          %279 = dma.hbm_to_vmem [thread:$0]  %s5, 1024, %s274, [#allocation12], 64, 64, 4
        $region32: #{tpu_custom_call.1} parent=11 // pred_fallthru
          _
        // Predicated region
        $region33: #{tpu_custom_call.1} parent=11 // pred_check
          %p280 = pneg %p190
        $region34: #{tpu_custom_call.1} parent=11 // pred_check_branch
          %282 = sbr.rel (%p280) target = $region36
        $region35: #{tpu_custom_call.1} parent=11 // pred_region
          _
        $region36: #{tpu_custom_call.1} parent=11 // pred_fallthru
          _
      $region12: #{tpu_custom_call.1} parent=5 // pred_fallthru
        _
      %p283 = scmp.lt.s32.totalorder %s19, 2
      // Predicated region
      $region37: #{tpu_custom_call.1} parent=5 // pred_check
        %p284 = pneg %p283
      $region38: #{tpu_custom_call.1} parent=5 // pred_check_branch
        %286 = sbr.rel (%p284) target = $region40
      $region39: #{tpu_custom_call.1} parent=5 // pred_region
        // Predicated region
        $region41: #{tpu_custom_call.1} parent=39 // pred_check
          %p287 = pneg %p53
        $region42: #{tpu_custom_call.1} parent=39 // pred_check_branch
          %289 = sbr.rel (%p287) target = $region44
        $region43: #{tpu_custom_call.1} parent=39 // pred_region
          %s290 = sand.u32 %s43, 1
          %s291 = scalar_lea.sflag [#allocation6], %s290
          %s292 = sand.u32 %s43, 1
          %s293 = smul.addr %s292, 16
          %s294 = scalar_lea.vmem [#allocation5], %s293
          %s295 = smul.u32 4, %s27
          %s297 = ssub.s32 256, 256
          %298 = vsyncadd %s291, %s297
          %s299 = sadd.s32 %s26, %s295
          %s300 = smul.addr %s299, 64
          %s301 = scalar_lea.hbm %s0, %s300
          %s302 = sshll.u32 %s294, 4
          %s303 = int_to_ptr.vmem [resolvable:$true] %s302
          %308 = dma.hbm_to_vmem [thread:$0]  %s301, 256, %s303, %s291, 64, 64, 4
        $region44: #{tpu_custom_call.1} parent=39 // pred_fallthru
          _
      $region40: #{tpu_custom_call.1} parent=5 // pred_fallthru
        _
      %p309 = scmp.le.s32.totalorder 1, %s19
      %p310 = scmp.lt.s32.totalorder %s19, 3
      %p311 = pnand %p309, %p310
      %p312 = pneg %p311
      // Predicated region
      $region45: #{tpu_custom_call.1} parent=5 // pred_check
        _
      $region46: #{tpu_custom_call.1} parent=5 // pred_check_branch
        %314 = sbr.rel (%p311) target = $region48
      $region47: #{tpu_custom_call.1} parent=5 // pred_region
        %s315 = ssub.s32 %s19, 1
        %s316 = sand.u32 %s46, 1
        %s317 = scalar_lea.sflag [#allocation6], %s316
        %s318 = sand.u32 %s46, 1
        %s319 = smul.addr %s318, 16
        %s320 = scalar_lea.vmem [#allocation5], %s319
        // Predicated region
        $region49: #{tpu_custom_call.1} parent=47 // pred_check
          %p321 = pneg %p59
        $region50: #{tpu_custom_call.1} parent=47 // pred_check_branch
          %323 = sbr.rel (%p321) target = $region52
        $region51: #{tpu_custom_call.1} parent=47 // pred_region
          %324 = dma.done %s317, 256
        $region52: #{tpu_custom_call.1} parent=47 // pred_fallthru
          _
        // Predicated region
        $region53: #{tpu_custom_call.1} parent=47 // pred_check
          %p325 = pneg %p80
        $region54: #{tpu_custom_call.1} parent=47 // pred_check_branch
          %327 = sbr.rel (%p325) target = $region56
        $region55: #{tpu_custom_call.1} parent=47 // pred_region
          %328 = dma.done [#allocation9], 4096
        $region56: #{tpu_custom_call.1} parent=47 // pred_fallthru
          _
        // Predicated region
        $region57: #{tpu_custom_call.1} parent=47 // pred_check
          %p329 = pneg %p101
        $region58: #{tpu_custom_call.1} parent=47 // pred_check_branch
          %331 = sbr.rel (%p329) target = $region60
        $region59: #{tpu_custom_call.1} parent=47 // pred_region
          %332 = dma.done [#allocation9], 4096
        $region60: #{tpu_custom_call.1} parent=47 // pred_fallthru
          _
        // Predicated region
        $region61: #{tpu_custom_call.1} parent=47 // pred_check
          %p333 = pneg %p169
        $region62: #{tpu_custom_call.1} parent=47 // pred_check_branch
          %335 = sbr.rel (%p333) target = $region64
        $region63: #{tpu_custom_call.1} parent=47 // pred_region
          %336 = dma.done [#allocation12], 1024
        $region64: #{tpu_custom_call.1} parent=47 // pred_fallthru
          _
        %s337 = sand.u32 %s46, 1
        %s338 = scalar_lea.sflag [#allocation6], %s337
        %s339 = sand.u32 %s46, 1
        %s340 = smul.addr %s339, 16
        %s341 = scalar_lea.vmem [#allocation5], %s340
        %p342 = pneg %p59
        %p343 = pneg %p56
        %p344 = pneg %p80
        %p345 = pneg %p77
        %p346 = pneg %p101
        %p347 = pneg %p98
        %p348 = pneg %p122
        %p349 = pneg %p119
        %p350 = scmp.lt.s32.totalorder %s28, 0
        %s351 = scalar_select %p350, %s28, 0
        %s352 = smul.addr %s351, 8
        %s353 = scalar_lea.vmem %s4, %s352
        %p354 = pneg %p148
        %p355 = pneg %p145
        %p356 = pneg %p169
        %p357 = pneg %p166
        %p358 = pneg %p190
        %p359 = pneg %p187
        %p360 = pneg %p216
        %p361 = pneg %p213
        %s362 = smul.u32 4, %s29
        %p363 = scmp.lt.s32.totalorder %s28, 0
        %s364 = scalar_select %p363, %s28, 0
        %s365 = smul.addr %s364, 8
        %s366 = scalar_lea.vmem %s4, %s365
        %p368 = scmp.eq.s32.totalorder %s29, 0
        // Predicated region
        $region65: #{tpu_custom_call.1} parent=47 // pred_check
          %p369 = pneg %p368
        $region66: #{tpu_custom_call.1} parent=47 // pred_check_branch
          %371 = sbr.rel (%p369) target = $region68
        $region67: #{tpu_custom_call.1} parent=47 // pred_region
          %372 = vst [vmem:[#allocation2] sm:$0xff] 0.0
          %373 = vst [vmem:[#allocation3] sm:$0xff] 0.0
          %374 = vst [vmem:[#allocation4] sm:$0xff] 0.0
        $region68: #{tpu_custom_call.1} parent=47 // pred_fallthru
          _
        %v375 = vld [vmem:[%s366] sm:$0xff]
        %s376 = smul.u32 %s29, 4
        %v377 = vld [vmem:[#allocation2] sm:$0xff]
        %v378 = vld [vmem:[#allocation3] sm:$0xff]
        %v379 = vld [vmem:[#allocation4] sm:$0xff]
        %v380 = vld [vmem:[%s320] sm:$0xf]
        %v381 = vld [vmem:[#allocation8] sm:$0xff]
        %v382 = vld [vmem:[#allocation8 + $0x8] sm:$0xff]
        %v383 = vld [vmem:[#allocation8 + $0x10] sm:$0xff]
        %v384 = vld [vmem:[#allocation8 + $0x18] sm:$0xff]
        %v385 = vld [vmem:[#allocation8 + $0x20] sm:$0xff]
        %v386 = vld [vmem:[#allocation8 + $0x28] sm:$0xff]
        %v387 = vld [vmem:[#allocation8 + $0x30] sm:$0xff]
        %v388 = vld [vmem:[#allocation8 + $0x38] sm:$0xff]
        %v389 = vld [vmem:[#allocation8 + $0x40] sm:$0xff]
        %v390 = vld [vmem:[#allocation8 + $0x48] sm:$0xff]
        %v391 = vld [vmem:[#allocation8 + $0x50] sm:$0xff]
        %v392 = vld [vmem:[#allocation8 + $0x58] sm:$0xff]
        %v393 = vld [vmem:[#allocation8 + $0x60] sm:$0xff]
        %v394 = vld [vmem:[#allocation8 + $0x68] sm:$0xff]
        %v395 = vld [vmem:[#allocation8 + $0x70] sm:$0xff]
        %v396 = vld [vmem:[#allocation8 + $0x78] sm:$0xff]
        %v397 = vld [vmem:[#allocation8 + $0x80] sm:$0xff]
        %v398 = vld [vmem:[#allocation8 + $0x88] sm:$0xff]
        %v399 = vld [vmem:[#allocation8 + $0x90] sm:$0xff]
        %v400 = vld [vmem:[#allocation8 + $0x98] sm:$0xff]
        %v401 = vld [vmem:[#allocation8 + $0xa0] sm:$0xff]
        %v402 = vld [vmem:[#allocation8 + $0xa8] sm:$0xff]
        %v403 = vld [vmem:[#allocation8 + $0xb0] sm:$0xff]
        %v404 = vld [vmem:[#allocation8 + $0xb8] sm:$0xff]
        %v405 = vld [vmem:[#allocation8 + $0xc0] sm:$0xff]
        %v406 = vld [vmem:[#allocation8 + $0xc8] sm:$0xff]
        %v407 = vld [vmem:[#allocation8 + $0xd0] sm:$0xff]
        %v408 = vld [vmem:[#allocation8 + $0xd8] sm:$0xff]
        %v409 = vld [vmem:[#allocation8 + $0xe0] sm:$0xff]
        %v410 = vld [vmem:[#allocation8 + $0xe8] sm:$0xff]
        %v411 = vld [vmem:[#allocation8 + $0xf0] sm:$0xff]
        %v412 = vld [vmem:[#allocation8 + $0xf8] sm:$0xff]
        %v413 = vpack.c.bf16 %v377, %v377
        %v414 = vld [vmem:[#allocation10] sm:$0xff]
        %v415 = vld [vmem:[#allocation10 + $0x8] sm:$0xff]
        %v416 = vld [vmem:[#allocation10 + $0x10] sm:$0xff]
        %v417 = vld [vmem:[#allocation10 + $0x18] sm:$0xff]
        %v418 = vld [vmem:[#allocation10 + $0x20] sm:$0xff]
        %v419 = vld [vmem:[#allocation10 + $0x28] sm:$0xff]
        %v420 = vld [vmem:[#allocation10 + $0x30] sm:$0xff]
        %v421 = vld [vmem:[#allocation10 + $0x38] sm:$0xff]
        %v422 = vld [vmem:[#allocation10 + $0x40] sm:$0xff]
        %v423 = vld [vmem:[#allocation10 + $0x48] sm:$0xff]
        %v424 = vld [vmem:[#allocation10 + $0x50] sm:$0xff]
        %v425 = vld [vmem:[#allocation10 + $0x58] sm:$0xff]
        %v426 = vld [vmem:[#allocation10 + $0x60] sm:$0xff]
        %v427 = vld [vmem:[#allocation10 + $0x68] sm:$0xff]
        %v428 = vld [vmem:[#allocation10 + $0x70] sm:$0xff]
        %v429 = vld [vmem:[#allocation10 + $0x78] sm:$0xff]
        %v430 = vld [vmem:[#allocation10 + $0x80] sm:$0xff]
        %v431 = vld [vmem:[#allocation10 + $0x88] sm:$0xff]
        %v432 = vld [vmem:[#allocation10 + $0x90] sm:$0xff]
        %v433 = vld [vmem:[#allocation10 + $0x98] sm:$0xff]
        %v434 = vld [vmem:[#allocation10 + $0xa0] sm:$0xff]
        %v435 = vld [vmem:[#allocation10 + $0xa8] sm:$0xff]
        %v436 = vld [vmem:[#allocation10 + $0xb0] sm:$0xff]
        %v437 = vld [vmem:[#allocation10 + $0xb8] sm:$0xff]
        %v438 = vld [vmem:[#allocation10 + $0xc0] sm:$0xff]
        %v439 = vld [vmem:[#allocation10 + $0xc8] sm:$0xff]
        %v440 = vld [vmem:[#allocation10 + $0xd0] sm:$0xff]
        %v441 = vld [vmem:[#allocation10 + $0xd8] sm:$0xff]
        %v442 = vld [vmem:[#allocation10 + $0xe0] sm:$0xff]
        %v443 = vld [vmem:[#allocation10 + $0xe8] sm:$0xff]
        %v444 = vld [vmem:[#allocation10 + $0xf0] sm:$0xff]
        %v445 = vld [vmem:[#allocation10 + $0xf8] sm:$0xff]
        %v478 = vunpack.c.l.b16 %v414
        %v479 = vunpack.c.h.b16 %v414
        %v480 = vunpack.c.l.b16 %v415
        %v481 = vunpack.c.h.b16 %v415
        %v482 = vunpack.c.l.b16 %v416
        %v483 = vunpack.c.h.b16 %v416
        %v484 = vunpack.c.l.b16 %v417
        %v485 = vunpack.c.h.b16 %v417
        %v486 = vunpack.c.l.b16 %v418
        %v487 = vunpack.c.h.b16 %v418
        %v488 = vunpack.c.l.b16 %v419
        %v489 = vunpack.c.h.b16 %v419
        %v490 = vunpack.c.l.b16 %v420
        %v491 = vunpack.c.h.b16 %v420
        %v492 = vunpack.c.l.b16 %v421
        %v493 = vunpack.c.h.b16 %v421
        %v494 = vunpack.c.l.b16 %v422
        %v495 = vunpack.c.h.b16 %v422
        %v496 = vunpack.c.l.b16 %v423
        %v497 = vunpack.c.h.b16 %v423
        %v498 = vunpack.c.l.b16 %v424
        %v499 = vunpack.c.h.b16 %v424
        %v500 = vunpack.c.l.b16 %v425
        %v501 = vunpack.c.h.b16 %v425
        %v502 = vunpack.c.l.b16 %v426
        %v503 = vunpack.c.h.b16 %v426
        %v504 = vunpack.c.l.b16 %v427
        %v505 = vunpack.c.h.b16 %v427
        %v506 = vunpack.c.l.b16 %v428
        %v507 = vunpack.c.h.b16 %v428
        %v508 = vunpack.c.l.b16 %v429
        %v509 = vunpack.c.h.b16 %v429
        %v510 = vunpack.c.l.b16 %v430
        %v511 = vunpack.c.h.b16 %v430
        %v512 = vunpack.c.l.b16 %v431
        %v513 = vunpack.c.h.b16 %v431
        %v514 = vunpack.c.l.b16 %v432
        %v515 = vunpack.c.h.b16 %v432
        %v516 = vunpack.c.l.b16 %v433
        %v517 = vunpack.c.h.b16 %v433
        %v518 = vunpack.c.l.b16 %v434
        %v519 = vunpack.c.h.b16 %v434
        %v520 = vunpack.c.l.b16 %v435
        %v521 = vunpack.c.h.b16 %v435
        %v522 = vunpack.c.l.b16 %v436
        %v523 = vunpack.c.h.b16 %v436
        %v524 = vunpack.c.l.b16 %v437
        %v525 = vunpack.c.h.b16 %v437
        %v526 = vunpack.c.l.b16 %v438
        %v527 = vunpack.c.h.b16 %v438
        %v528 = vunpack.c.l.b16 %v439
        %v529 = vunpack.c.h.b16 %v439
        %v530 = vunpack.c.l.b16 %v440
        %v531 = vunpack.c.h.b16 %v440
        %v532 = vunpack.c.l.b16 %v441
        %v533 = vunpack.c.h.b16 %v441
        %v534 = vunpack.c.l.b16 %v442
        %v535 = vunpack.c.h.b16 %v442
        %v536 = vunpack.c.l.b16 %v443
        %v537 = vunpack.c.h.b16 %v443
        %v538 = vunpack.c.l.b16 %v444
        %v539 = vunpack.c.h.b16 %v444
        %v540 = vunpack.c.l.b16 %v445
        %v541 = vunpack.c.h.b16 %v445
        %v542 = vpack.c.b16 %v482, %v478
        %v543 = vpack.c.b16 %v483, %v479
        %v544 = vpack.c.b16 %v484, %v480
        %v545 = vpack.c.b16 %v485, %v481
        %v546 = vpack.c.b16 %v490, %v486
        %v547 = vpack.c.b16 %v491, %v487
        %v548 = vpack.c.b16 %v492, %v488
        %v549 = vpack.c.b16 %v493, %v489
        %v550 = vpack.c.b16 %v498, %v494
        %v551 = vpack.c.b16 %v499, %v495
        %v552 = vpack.c.b16 %v500, %v496
        %v553 = vpack.c.b16 %v501, %v497
        %v554 = vpack.c.b16 %v506, %v502
        %v555 = vpack.c.b16 %v507, %v503
        %v556 = vpack.c.b16 %v508, %v504
        %v557 = vpack.c.b16 %v509, %v505
        %v558 = vpack.c.b16 %v514, %v510
        %v559 = vpack.c.b16 %v515, %v511
        %v560 = vpack.c.b16 %v516, %v512
        %v561 = vpack.c.b16 %v517, %v513
        %v562 = vpack.c.b16 %v522, %v518
        %v563 = vpack.c.b16 %v523, %v519
        %v564 = vpack.c.b16 %v524, %v520
        %v565 = vpack.c.b16 %v525, %v521
        %v566 = vpack.c.b16 %v530, %v526
        %v567 = vpack.c.b16 %v531, %v527
        %v568 = vpack.c.b16 %v532, %v528
        %v569 = vpack.c.b16 %v533, %v529
        %v570 = vpack.c.b16 %v538, %v534
        %v571 = vpack.c.b16 %v539, %v535
        %v572 = vpack.c.b16 %v540, %v536
        %v573 = vpack.c.b16 %v541, %v537
        %606 = vmatprep.subr.bf16.mxu0 %v571
        %607 = vmatpush1.bf16.msra.mxu0 %v570
        %608 = vmatprep.subr.bf16.mxu0 %v567
        %609 = vmatpush1.bf16.msra.mxu0 %v566
        %610 = vmatprep.subr.bf16.mxu0 %v563
        %611 = vmatpush1.bf16.msra.mxu0 %v562
        %612 = vmatprep.subr.bf16.mxu0 %v559
        %613 = vmatpush1.bf16.msra.mxu0 %v558
        %614 = vmatprep.subr.bf16.mxu0 %v555
        %615 = vmatpush1.bf16.msra.mxu0 %v554
        %616 = vmatprep.subr.bf16.mxu0 %v551
        %617 = vmatpush1.bf16.msra.mxu0 %v550
        %618 = vmatprep.subr.bf16.mxu0 %v547
        %619 = vmatpush1.bf16.msra.mxu0 %v546
        %620 = vmatprep.subr.bf16.mxu0 %v543
        %621 = vmatpush1.bf16.msra.mxu0 %v542
        %622 = vmatprep.subr.bf16.mxu0 0
        %623 = vmatpush2.bf16.msra.mxu0 0
        %624 = vmatprep.subr.bf16.mxu0 0
        %625 = vmatpush2.bf16.msra.mxu0 0
        %626 = vmatprep.subr.bf16.mxu0 0
        %627 = vmatpush2.bf16.msra.mxu0 0
        %628 = vmatprep.subr.bf16.mxu0 0
        %629 = vmatpush2.bf16.msra.mxu0 0
        %630 = vmatprep.subr.bf16.mxu0 0
        %631 = vmatpush2.bf16.msra.mxu0 0
        %632 = vmatprep.subr.bf16.mxu0 0
        %633 = vmatpush2.bf16.msra.mxu0 0
        %634 = vmatprep.subr.bf16.mxu0 0
        %635 = vmatpush2.bf16.msra.mxu0 0
        %636 = vmatprep.subr.bf16.mxu0 0
        %637 = vmatpush2.bf16.msra.mxu0 0
        %638 = vmatprep.mubr.bf16.mxu0 0
        %639 = vmatmul.mubr.bf16.gmra.mxu0 %v413
        %v640 = vpop.f32.mrf.mxu0
        %v641 = vadd.f32 0.0, %v640
        %v642 = vpop.f32.mrf.mxu0
        %v643 = vadd.f32 0.0, %v642
        %v644 = vpop.f32.mrf.mxu0
        %v645 = vpop.f32.mrf.mxu0
        %646 = vdwg.mxu0
        %647 = vmatprep.subr.bf16.mxu0 %v573
        %648 = vmatpush1.bf16.msra.mxu0 %v572
        %649 = vmatprep.subr.bf16.mxu0 %v569
        %650 = vmatpush1.bf16.msra.mxu0 %v568
        %651 = vmatprep.subr.bf16.mxu0 %v565
        %652 = vmatpush1.bf16.msra.mxu0 %v564
        %653 = vmatprep.subr.bf16.mxu0 %v561
        %654 = vmatpush1.bf16.msra.mxu0 %v560
        %655 = vmatprep.subr.bf16.mxu0 %v557
        %656 = vmatpush1.bf16.msra.mxu0 %v556
        %657 = vmatprep.subr.bf16.mxu0 %v553
        %658 = vmatpush1.bf16.msra.mxu0 %v552
        %659 = vmatprep.subr.bf16.mxu0 %v549
        %660 = vmatpush1.bf16.msra.mxu0 %v548
        %661 = vmatprep.subr.bf16.mxu0 %v545
        %662 = vmatpush1.bf16.msra.mxu0 %v544
        %663 = vmatprep.subr.bf16.mxu0 0
        %664 = vmatpush2.bf16.msra.mxu0 0
        %665 = vmatprep.subr.bf16.mxu0 0
        %666 = vmatpush2.bf16.msra.mxu0 0
        %667 = vmatprep.subr.bf16.mxu0 0
        %668 = vmatpush2.bf16.msra.mxu0 0
        %669 = vmatprep.subr.bf16.mxu0 0
        %670 = vmatpush2.bf16.msra.mxu0 0
        %671 = vmatprep.subr.bf16.mxu0 0
        %672 = vmatpush2.bf16.msra.mxu0 0
        %673 = vmatprep.subr.bf16.mxu0 0
        %674 = vmatpush2.bf16.msra.mxu0 0
        %675 = vmatprep.subr.bf16.mxu0 0
        %676 = vmatpush2.bf16.msra.mxu0 0
        %677 = vmatprep.subr.bf16.mxu0 0
        %678 = vmatpush2.bf16.msra.mxu0 0
        %679 = vmatprep.mubr.bf16.mxu0 0
        %680 = vmatmul.mubr.bf16.gmra.mxu0 %v413
        %v681 = vpop.f32.mrf.mxu0
        %v682 = vadd.f32 0.0, %v681
        %v683 = vpop.f32.mrf.mxu0
        %v684 = vadd.f32 0.0, %v683
        %v685 = vpop.f32.mrf.mxu0
        %v686 = vpop.f32.mrf.mxu0
        %687 = vdwg.mxu0
        %v720 = vunpack.c.l.b16 %v381
        %v721 = vunpack.c.h.b16 %v381
        %v722 = vunpack.c.l.b16 %v382
        %v723 = vunpack.c.h.b16 %v382
        %v724 = vunpack.c.l.b16 %v383
        %v725 = vunpack.c.h.b16 %v383
        %v726 = vunpack.c.l.b16 %v384
        %v727 = vunpack.c.h.b16 %v384
        %v728 = vunpack.c.l.b16 %v385
        %v729 = vunpack.c.h.b16 %v385
        %v730 = vunpack.c.l.b16 %v386
        %v731 = vunpack.c.h.b16 %v386
        %v732 = vunpack.c.l.b16 %v387
        %v733 = vunpack.c.h.b16 %v387
        %v734 = vunpack.c.l.b16 %v388
        %v735 = vunpack.c.h.b16 %v388
        %v736 = vunpack.c.l.b16 %v389
        %v737 = vunpack.c.h.b16 %v389
        %v738 = vunpack.c.l.b16 %v390
        %v739 = vunpack.c.h.b16 %v390
        %v740 = vunpack.c.l.b16 %v391
        %v741 = vunpack.c.h.b16 %v391
        %v742 = vunpack.c.l.b16 %v392
        %v743 = vunpack.c.h.b16 %v392
        %v744 = vunpack.c.l.b16 %v393
        %v745 = vunpack.c.h.b16 %v393
        %v746 = vunpack.c.l.b16 %v394
        %v747 = vunpack.c.h.b16 %v394
        %v748 = vunpack.c.l.b16 %v395
        %v749 = vunpack.c.h.b16 %v395
        %v750 = vunpack.c.l.b16 %v396
        %v751 = vunpack.c.h.b16 %v396
        %v752 = vunpack.c.l.b16 %v397
        %v753 = vunpack.c.h.b16 %v397
        %v754 = vunpack.c.l.b16 %v398
        %v755 = vunpack.c.h.b16 %v398
        %v756 = vunpack.c.l.b16 %v399
        %v757 = vunpack.c.h.b16 %v399
        %v758 = vunpack.c.l.b16 %v400
        %v759 = vunpack.c.h.b16 %v400
        %v760 = vunpack.c.l.b16 %v401
        %v761 = vunpack.c.h.b16 %v401
        %v762 = vunpack.c.l.b16 %v402
        %v763 = vunpack.c.h.b16 %v402
        %v764 = vunpack.c.l.b16 %v403
        %v765 = vunpack.c.h.b16 %v403
        %v766 = vunpack.c.l.b16 %v404
        %v767 = vunpack.c.h.b16 %v404
        %v768 = vunpack.c.l.b16 %v405
        %v769 = vunpack.c.h.b16 %v405
        %v770 = vunpack.c.l.b16 %v406
        %v771 = vunpack.c.h.b16 %v406
        %v772 = vunpack.c.l.b16 %v407
        %v773 = vunpack.c.h.b16 %v407
        %v774 = vunpack.c.l.b16 %v408
        %v775 = vunpack.c.h.b16 %v408
        %v776 = vunpack.c.l.b16 %v409
        %v777 = vunpack.c.h.b16 %v409
        %v778 = vunpack.c.l.b16 %v410
        %v779 = vunpack.c.h.b16 %v410
        %v780 = vunpack.c.l.b16 %v411
        %v781 = vunpack.c.h.b16 %v411
        %v782 = vunpack.c.l.b16 %v412
        %v783 = vunpack.c.h.b16 %v412
        %v784 = vpack.c.b16 %v724, %v720
        %v785 = vpack.c.b16 %v725, %v721
        %v786 = vpack.c.b16 %v726, %v722
        %v787 = vpack.c.b16 %v727, %v723
        %v788 = vpack.c.b16 %v732, %v728
        %v789 = vpack.c.b16 %v733, %v729
        %v790 = vpack.c.b16 %v734, %v730
        %v791 = vpack.c.b16 %v735, %v731
        %v792 = vpack.c.b16 %v740, %v736
        %v793 = vpack.c.b16 %v741, %v737
        %v794 = vpack.c.b16 %v742, %v738
        %v795 = vpack.c.b16 %v743, %v739
        %v796 = vpack.c.b16 %v748, %v744
        %v797 = vpack.c.b16 %v749, %v745
        %v798 = vpack.c.b16 %v750, %v746
        %v799 = vpack.c.b16 %v751, %v747
        %v800 = vpack.c.b16 %v756, %v752
        %v801 = vpack.c.b16 %v757, %v753
        %v802 = vpack.c.b16 %v758, %v754
        %v803 = vpack.c.b16 %v759, %v755
        %v804 = vpack.c.b16 %v764, %v760
        %v805 = vpack.c.b16 %v765, %v761
        %v806 = vpack.c.b16 %v766, %v762
        %v807 = vpack.c.b16 %v767, %v763
        %v808 = vpack.c.b16 %v772, %v768
        %v809 = vpack.c.b16 %v773, %v769
        %v810 = vpack.c.b16 %v774, %v770
        %v811 = vpack.c.b16 %v775, %v771
        %v812 = vpack.c.b16 %v780, %v776
        %v813 = vpack.c.b16 %v781, %v777
        %v814 = vpack.c.b16 %v782, %v778
        %v815 = vpack.c.b16 %v783, %v779
        %848 = vmatprep.subr.bf16.mxu0 %v813
        %849 = vmatpush1.bf16.msra.mxu0 %v812
        %850 = vmatprep.subr.bf16.mxu0 %v809
        %851 = vmatpush1.bf16.msra.mxu0 %v808
        %852 = vmatprep.subr.bf16.mxu0 %v805
        %853 = vmatpush1.bf16.msra.mxu0 %v804
        %854 = vmatprep.subr.bf16.mxu0 %v801
        %855 = vmatpush1.bf16.msra.mxu0 %v800
        %856 = vmatprep.subr.bf16.mxu0 %v797
        %857 = vmatpush1.bf16.msra.mxu0 %v796
        %858 = vmatprep.subr.bf16.mxu0 %v793
        %859 = vmatpush1.bf16.msra.mxu0 %v792
        %860 = vmatprep.subr.bf16.mxu0 %v789
        %861 = vmatpush1.bf16.msra.mxu0 %v788
        %862 = vmatprep.subr.bf16.mxu0 %v785
        %863 = vmatpush1.bf16.msra.mxu0 %v784
        %864 = vmatprep.subr.bf16.mxu0 0
        %865 = vmatpush2.bf16.msra.mxu0 0
        %866 = vmatprep.subr.bf16.mxu0 0
        %867 = vmatpush2.bf16.msra.mxu0 0
        %868 = vmatprep.subr.bf16.mxu0 0
        %869 = vmatpush2.bf16.msra.mxu0 0
        %870 = vmatprep.subr.bf16.mxu0 0
        %871 = vmatpush2.bf16.msra.mxu0 0
        %872 = vmatprep.subr.bf16.mxu0 0
        %873 = vmatpush2.bf16.msra.mxu0 0
        %874 = vmatprep.subr.bf16.mxu0 0
        %875 = vmatpush2.bf16.msra.mxu0 0
        %876 = vmatprep.subr.bf16.mxu0 0
        %877 = vmatpush2.bf16.msra.mxu0 0
        %878 = vmatprep.subr.bf16.mxu0 0
        %879 = vmatpush2.bf16.msra.mxu0 0
        %880 = vmatprep.mubr.bf16.mxu0 0
        %881 = vmatmul.mubr.bf16.gmra.mxu0 %v380
        %v882 = vpop.f32.mrf.mxu0
        %v883 = vadd.f32 %v641, %v882
        %v884 = vpop.f32.mrf.mxu0
        %v885 = vadd.f32 %v643, %v884
        %v886 = vpop.f32.mrf.mxu0
        %v887 = vpop.f32.mrf.mxu0
        %888 = vdwg.mxu0
        %889 = vmatprep.subr.bf16.mxu0 %v815
        %890 = vmatpush1.bf16.msra.mxu0 %v814
        %891 = vmatprep.subr.bf16.mxu0 %v811
        %892 = vmatpush1.bf16.msra.mxu0 %v810
        %893 = vmatprep.subr.bf16.mxu0 %v807
        %894 = vmatpush1.bf16.msra.mxu0 %v806
        %895 = vmatprep.subr.bf16.mxu0 %v803
        %896 = vmatpush1.bf16.msra.mxu0 %v802
        %897 = vmatprep.subr.bf16.mxu0 %v799
        %898 = vmatpush1.bf16.msra.mxu0 %v798
        %899 = vmatprep.subr.bf16.mxu0 %v795
        %900 = vmatpush1.bf16.msra.mxu0 %v794
        %901 = vmatprep.subr.bf16.mxu0 %v791
        %902 = vmatpush1.bf16.msra.mxu0 %v790
        %903 = vmatprep.subr.bf16.mxu0 %v787
        %904 = vmatpush1.bf16.msra.mxu0 %v786
        %905 = vmatprep.subr.bf16.mxu0 0
        %906 = vmatpush2.bf16.msra.mxu0 0
        %907 = vmatprep.subr.bf16.mxu0 0
        %908 = vmatpush2.bf16.msra.mxu0 0
        %909 = vmatprep.subr.bf16.mxu0 0
        %910 = vmatpush2.bf16.msra.mxu0 0
        %911 = vmatprep.subr.bf16.mxu0 0
        %912 = vmatpush2.bf16.msra.mxu0 0
        %913 = vmatprep.subr.bf16.mxu0 0
        %914 = vmatpush2.bf16.msra.mxu0 0
        %915 = vmatprep.subr.bf16.mxu0 0
        %916 = vmatpush2.bf16.msra.mxu0 0
        %917 = vmatprep.subr.bf16.mxu0 0
        %918 = vmatpush2.bf16.msra.mxu0 0
        %919 = vmatprep.subr.bf16.mxu0 0
        %920 = vmatpush2.bf16.msra.mxu0 0
        %921 = vmatprep.mubr.bf16.mxu0 0
        %922 = vmatmul.mubr.bf16.gmra.mxu0 %v380
        %v923 = vpop.f32.mrf.mxu0
        %v924 = vadd.f32 %v682, %v923
        %v925 = vpop.f32.mrf.mxu0
        %v926 = vadd.f32 %v684, %v925
        %v927 = vpop.f32.mrf.mxu0
        %v928 = vpop.f32.mrf.mxu0
        %929 = vdwg.mxu0
        %v930 = vld [vmem:[%s3] sm:$0xf]
        %v932 = vlaneseq
        %v933 = vshrl.u32 %v932, 7
        %v934 = vsub.s32 0, %v933
        %v935 = vrot.slane %v930, %v934
        %v936 = vlaneseq
        %v937 = vshrl.u32 %v936, 7
        %v938 = vsub.s32 1, %v937
        %v939 = vrot.slane %v930, %v938
        %v940 = vlaneseq
        %v941 = vshrl.u32 %v940, 7
        %v942 = vsub.s32 2, %v941
        %v943 = vrot.slane %v930, %v942
        %v944 = vlaneseq
        %v945 = vshrl.u32 %v944, 7
        %v946 = vsub.s32 3, %v945
        %v947 = vrot.slane %v930, %v946
        %v952 = vadd.f32 %v883, %v935
        %v953 = vadd.f32 %v885, %v939
        %v954 = vadd.f32 %v924, %v943
        %v955 = vadd.f32 %v926, %v947
        %v956 = vxor.u32 %v952, 2147483648
        %v957 = vxor.u32 %v953, 2147483648
        %v958 = vxor.u32 %v954, 2147483648
        %v959 = vmul.f32 %v956, 1.442695
        %v960 = vpow.pop %v959
        %v961 = vmul.f32 %v957, 1.442695
        %v962 = vpow.pop %v961
        %v963 = vmul.f32 %v958, 1.442695
        %v964 = vpow.pop %v963
        %v965 = vadd.f32 %v960, 1.0
        %v966 = vadd.f32 %v962, 1.0
        %v967 = vadd.f32 %v964, 1.0
        %v968 = vrcp.pop %v965
        %v969 = vmul.f32 1.0, %v968
        %v970 = vrcp.pop %v966
        %v971 = vmul.f32 1.0, %v970
        %v972 = vrcp.pop %v967
        %v973 = vmul.f32 1.0, %v972
        %v974 = vtanh.pop %v955
        %v975 = vmul.f32 %v971, %v378
        %v976 = vmul.f32 %v974, %v969
        %v977 = vadd.f32 %v975, %v976
        %v978 = vtanh.pop %v977
        %v979 = vmul.f32 %v973, %v978
        %v980 = vstv %s376
        %vm981 = vcmp.eq.s32.totalorder %v375, %v980
        %v982 = vsel %vm981, 1, 0
        %983 = vset.pattern.permute.xlu0 0
        %984 = vperm.xlu0 %983, %v982
        %v985 = vpop.permute.xlu0 %984
        %vm986 = vcmp.eq.s32.totalorder %v985, 1
        %v987 = vsel %vm986, %v979, %v379
        %s988 = scalar_lea.vmem %s320, 4 [#allocation5]
        %v989 = vld [vmem:[%s988] sm:$0xf]
        %v990 = vpack.c.bf16 %v979, %v979
        %991 = vmatprep.subr.bf16.mxu0 %v571
        %992 = vmatpush1.bf16.msra.mxu0 %v570
        %993 = vmatprep.subr.bf16.mxu0 %v567
        %994 = vmatpush1.bf16.msra.mxu0 %v566
        %995 = vmatprep.subr.bf16.mxu0 %v563
        %996 = vmatpush1.bf16.msra.mxu0 %v562
        %997 = vmatprep.subr.bf16.mxu0 %v559
        %998 = vmatpush1.bf16.msra.mxu0 %v558
        %999 = vmatprep.subr.bf16.mxu0 %v555
        %1000 = vmatpush1.bf16.msra.mxu0 %v554
        %1001 = vmatprep.subr.bf16.mxu0 %v551
        %1002 = vmatpush1.bf16.msra.mxu0 %v550
        %1003 = vmatprep.subr.bf16.mxu0 %v547
        %1004 = vmatpush1.bf16.msra.mxu0 %v546
        %1005 = vmatprep.subr.bf16.mxu0 %v543
        %1006 = vmatpush1.bf16.msra.mxu0 %v542
        %1007 = vmatprep.subr.bf16.mxu0 0
        %1008 = vmatpush2.bf16.msra.mxu0 0
        %1009 = vmatprep.subr.bf16.mxu0 0
        %1010 = vmatpush2.bf16.msra.mxu0 0
        %1011 = vmatprep.subr.bf16.mxu0 0
        %1012 = vmatpush2.bf16.msra.mxu0 0
        %1013 = vmatprep.subr.bf16.mxu0 0
        %1014 = vmatpush2.bf16.msra.mxu0 0
        %1015 = vmatprep.subr.bf16.mxu0 0
        %1016 = vmatpush2.bf16.msra.mxu0 0
        %1017 = vmatprep.subr.bf16.mxu0 0
        %1018 = vmatpush2.bf16.msra.mxu0 0
        %1019 = vmatprep.subr.bf16.mxu0 0
        %1020 = vmatpush2.bf16.msra.mxu0 0
        %1021 = vmatprep.subr.bf16.mxu0 0
        %1022 = vmatpush2.bf16.msra.mxu0 0
        %1023 = vmatprep.mubr.bf16.mxu0 0
        %1024 = vmatmul.mubr.bf16.gmra.mxu0 %v990
        %v1025 = vpop.f32.mrf.mxu0
        %v1026 = vadd.f32 0.0, %v1025
        %v1027 = vpop.f32.mrf.mxu0
        %v1028 = vadd.f32 0.0, %v1027
        %v1029 = vpop.f32.mrf.mxu0
        %v1030 = vpop.f32.mrf.mxu0
        %1031 = vdwg.mxu0
        %1032 = vmatprep.subr.bf16.mxu0 %v573
        %1033 = vmatpush1.bf16.msra.mxu0 %v572
        %1034 = vmatprep.subr.bf16.mxu0 %v569
        %1035 = vmatpush1.bf16.msra.mxu0 %v568
        %1036 = vmatprep.subr.bf16.mxu0 %v565
        %1037 = vmatpush1.bf16.msra.mxu0 %v564
        %1038 = vmatprep.subr.bf16.mxu0 %v561
        %1039 = vmatpush1.bf16.msra.mxu0 %v560
        %1040 = vmatprep.subr.bf16.mxu0 %v557
        %1041 = vmatpush1.bf16.msra.mxu0 %v556
        %1042 = vmatprep.subr.bf16.mxu0 %v553
        %1043 = vmatpush1.bf16.msra.mxu0 %v552
        %1044 = vmatprep.subr.bf16.mxu0 %v549
        %1045 = vmatpush1.bf16.msra.mxu0 %v548
        %1046 = vmatprep.subr.bf16.mxu0 %v545
        %1047 = vmatpush1.bf16.msra.mxu0 %v544
        %1048 = vmatprep.subr.bf16.mxu0 0
        %1049 = vmatpush2.bf16.msra.mxu0 0
        %1050 = vmatprep.subr.bf16.mxu0 0
        %1051 = vmatpush2.bf16.msra.mxu0 0
        %1052 = vmatprep.subr.bf16.mxu0 0
        %1053 = vmatpush2.bf16.msra.mxu0 0
        %1054 = vmatprep.subr.bf16.mxu0 0
        %1055 = vmatpush2.bf16.msra.mxu0 0
        %1056 = vmatprep.subr.bf16.mxu0 0
        %1057 = vmatpush2.bf16.msra.mxu0 0
        %1058 = vmatprep.subr.bf16.mxu0 0
        %1059 = vmatpush2.bf16.msra.mxu0 0
        %1060 = vmatprep.subr.bf16.mxu0 0
        %1061 = vmatpush2.bf16.msra.mxu0 0
        %1062 = vmatprep.subr.bf16.mxu0 0
        %1063 = vmatpush2.bf16.msra.mxu0 0
        %1064 = vmatprep.mubr.bf16.mxu0 0
        %1065 = vmatmul.mubr.bf16.gmra.mxu0 %v990
        %v1066 = vpop.f32.mrf.mxu0
        %v1067 = vadd.f32 0.0, %v1066
        %v1068 = vpop.f32.mrf.mxu0
        %v1069 = vadd.f32 0.0, %v1068
        %v1070 = vpop.f32.mrf.mxu0
        %v1071 = vpop.f32.mrf.mxu0
        %1072 = vdwg.mxu0
        %1073 = vmatprep.subr.bf16.mxu0 %v813
        %1074 = vmatpush1.bf16.msra.mxu0 %v812
        %1075 = vmatprep.subr.bf16.mxu0 %v809
        %1076 = vmatpush1.bf16.msra.mxu0 %v808
        %1077 = vmatprep.subr.bf16.mxu0 %v805
        %1078 = vmatpush1.bf16.msra.mxu0 %v804
        %1079 = vmatprep.subr.bf16.mxu0 %v801
        %1080 = vmatpush1.bf16.msra.mxu0 %v800
        %1081 = vmatprep.subr.bf16.mxu0 %v797
        %1082 = vmatpush1.bf16.msra.mxu0 %v796
        %1083 = vmatprep.subr.bf16.mxu0 %v793
        %1084 = vmatpush1.bf16.msra.mxu0 %v792
        %1085 = vmatprep.subr.bf16.mxu0 %v789
        %1086 = vmatpush1.bf16.msra.mxu0 %v788
        %1087 = vmatprep.subr.bf16.mxu0 %v785
        %1088 = vmatpush1.bf16.msra.mxu0 %v784
        %1089 = vmatprep.subr.bf16.mxu0 0
        %1090 = vmatpush2.bf16.msra.mxu0 0
        %1091 = vmatprep.subr.bf16.mxu0 0
        %1092 = vmatpush2.bf16.msra.mxu0 0
        %1093 = vmatprep.subr.bf16.mxu0 0
        %1094 = vmatpush2.bf16.msra.mxu0 0
        %1095 = vmatprep.subr.bf16.mxu0 0
        %1096 = vmatpush2.bf16.msra.mxu0 0
        %1097 = vmatprep.subr.bf16.mxu0 0
        %1098 = vmatpush2.bf16.msra.mxu0 0
        %1099 = vmatprep.subr.bf16.mxu0 0
        %1100 = vmatpush2.bf16.msra.mxu0 0
        %1101 = vmatprep.subr.bf16.mxu0 0
        %1102 = vmatpush2.bf16.msra.mxu0 0
        %1103 = vmatprep.subr.bf16.mxu0 0
        %1104 = vmatpush2.bf16.msra.mxu0 0
        %1105 = vmatprep.mubr.bf16.mxu0 0
        %1106 = vmatmul.mubr.bf16.gmra.mxu0 %v989
        %v1107 = vpop.f32.mrf.mxu0
        %v1108 = vadd.f32 %v1026, %v1107
        %v1109 = vpop.f32.mrf.mxu0
        %v1110 = vadd.f32 %v1028, %v1109
        %v1111 = vpop.f32.mrf.mxu0
        %v1112 = vpop.f32.mrf.mxu0
        %1113 = vdwg.mxu0
        %1114 = vmatprep.subr.bf16.mxu0 %v815
        %1115 = vmatpush1.bf16.msra.mxu0 %v814
        %1116 = vmatprep.subr.bf16.mxu0 %v811
        %1117 = vmatpush1.bf16.msra.mxu0 %v810
        %1118 = vmatprep.subr.bf16.mxu0 %v807
        %1119 = vmatpush1.bf16.msra.mxu0 %v806
        %1120 = vmatprep.subr.bf16.mxu0 %v803
        %1121 = vmatpush1.bf16.msra.mxu0 %v802
        %1122 = vmatprep.subr.bf16.mxu0 %v799
        %1123 = vmatpush1.bf16.msra.mxu0 %v798
        %1124 = vmatprep.subr.bf16.mxu0 %v795
        %1125 = vmatpush1.bf16.msra.mxu0 %v794
        %1126 = vmatprep.subr.bf16.mxu0 %v791
        %1127 = vmatpush1.bf16.msra.mxu0 %v790
        %1128 = vmatprep.subr.bf16.mxu0 %v787
        %1129 = vmatpush1.bf16.msra.mxu0 %v786
        %1130 = vmatprep.subr.bf16.mxu0 0
        %1131 = vmatpush2.bf16.msra.mxu0 0
        %1132 = vmatprep.subr.bf16.mxu0 0
        %1133 = vmatpush2.bf16.msra.mxu0 0
        %1134 = vmatprep.subr.bf16.mxu0 0
        %1135 = vmatpush2.bf16.msra.mxu0 0
        %1136 = vmatprep.subr.bf16.mxu0 0
        %1137 = vmatpush2.bf16.msra.mxu0 0
        %1138 = vmatprep.subr.bf16.mxu0 0
        %1139 = vmatpush2.bf16.msra.mxu0 0
        %1140 = vmatprep.subr.bf16.mxu0 0
        %1141 = vmatpush2.bf16.msra.mxu0 0
        %1142 = vmatprep.subr.bf16.mxu0 0
        %1143 = vmatpush2.bf16.msra.mxu0 0
        %1144 = vmatprep.subr.bf16.mxu0 0
        %1145 = vmatpush2.bf16.msra.mxu0 0
        %1146 = vmatprep.mubr.bf16.mxu0 0
        %1147 = vmatmul.mubr.bf16.gmra.mxu0 %v989
        %v1148 = vpop.f32.mrf.mxu0
        %v1149 = vadd.f32 %v1067, %v1148
        %v1150 = vpop.f32.mrf.mxu0
        %v1151 = vadd.f32 %v1069, %v1150
        %v1152 = vpop.f32.mrf.mxu0
        %v1153 = vpop.f32.mrf.mxu0
        %1154 = vdwg.mxu0
        %v1155 = vadd.f32 %v1108, %v935
        %v1156 = vadd.f32 %v1110, %v939
        %v1157 = vadd.f32 %v1149, %v943
        %v1158 = vadd.f32 %v1151, %v947
        %v1159 = vxor.u32 %v1155, 2147483648
        %v1160 = vxor.u32 %v1156, 2147483648
        %v1161 = vxor.u32 %v1157, 2147483648
        %v1162 = vmul.f32 %v1159, 1.442695
        %v1163 = vpow.pop %v1162
        %v1164 = vmul.f32 %v1160, 1.442695
        %v1165 = vpow.pop %v1164
        %v1166 = vmul.f32 %v1161, 1.442695
        %v1167 = vpow.pop %v1166
        %v1168 = vadd.f32 %v1163, 1.0
        %v1169 = vadd.f32 %v1165, 1.0
        %v1170 = vadd.f32 %v1167, 1.0
        %v1171 = vrcp.pop %v1168
        %v1172 = vmul.f32 1.0, %v1171
        %v1173 = vrcp.pop %v1169
        %v1174 = vmul.f32 1.0, %v1173
        %v1175 = vrcp.pop %v1170
        %v1176 = vmul.f32 1.0, %v1175
        %v1177 = vtanh.pop %v1158
        %v1178 = vmul.f32 %v1174, %v977
        %v1179 = vmul.f32 %v1177, %v1172
        %v1180 = vadd.f32 %v1178, %v1179
        %v1181 = vtanh.pop %v1180
        %v1182 = vmul.f32 %v1176, %v1181
        %s1183 = sadd.s32 %s376, 1
        %v1184 = vstv %s1183
        %vm1185 = vcmp.eq.s32.totalorder %v375, %v1184
        %v1186 = vsel %vm1185, 1, 0
        %1187 = vset.pattern.permute.xlu0 0
        %1188 = vperm.xlu0 %1187, %v1186
        %v1189 = vpop.permute.xlu0 %1188
        %vm1190 = vcmp.eq.s32.totalorder %v1189, 1
        %v1191 = vsel %vm1190, %v1182, %v987
        %s1192 = scalar_lea.vmem %s320, 8 [#allocation5]
        %v1193 = vld [vmem:[%s1192] sm:$0xf]
        %v1194 = vpack.c.bf16 %v1182, %v1182
        %1195 = vmatprep.subr.bf16.mxu0 %v571
        %1196 = vmatpush1.bf16.msra.mxu0 %v570
        %1197 = vmatprep.subr.bf16.mxu0 %v567
        %1198 = vmatpush1.bf16.msra.mxu0 %v566
        %1199 = vmatprep.subr.bf16.mxu0 %v563
        %1200 = vmatpush1.bf16.msra.mxu0 %v562
        %1201 = vmatprep.subr.bf16.mxu0 %v559
        %1202 = vmatpush1.bf16.msra.mxu0 %v558
        %1203 = vmatprep.subr.bf16.mxu0 %v555
        %1204 = vmatpush1.bf16.msra.mxu0 %v554
        %1205 = vmatprep.subr.bf16.mxu0 %v551
        %1206 = vmatpush1.bf16.msra.mxu0 %v550
        %1207 = vmatprep.subr.bf16.mxu0 %v547
        %1208 = vmatpush1.bf16.msra.mxu0 %v546
        %1209 = vmatprep.subr.bf16.mxu0 %v543
        %1210 = vmatpush1.bf16.msra.mxu0 %v542
        %1211 = vmatprep.subr.bf16.mxu0 0
        %1212 = vmatpush2.bf16.msra.mxu0 0
        %1213 = vmatprep.subr.bf16.mxu0 0
        %1214 = vmatpush2.bf16.msra.mxu0 0
        %1215 = vmatprep.subr.bf16.mxu0 0
        %1216 = vmatpush2.bf16.msra.mxu0 0
        %1217 = vmatprep.subr.bf16.mxu0 0
        %1218 = vmatpush2.bf16.msra.mxu0 0
        %1219 = vmatprep.subr.bf16.mxu0 0
        %1220 = vmatpush2.bf16.msra.mxu0 0
        %1221 = vmatprep.subr.bf16.mxu0 0
        %1222 = vmatpush2.bf16.msra.mxu0 0
        %1223 = vmatprep.subr.bf16.mxu0 0
        %1224 = vmatpush2.bf16.msra.mxu0 0
        %1225 = vmatprep.subr.bf16.mxu0 0
        %1226 = vmatpush2.bf16.msra.mxu0 0
        %1227 = vmatprep.mubr.bf16.mxu0 0
        %1228 = vmatmul.mubr.bf16.gmra.mxu0 %v1194
        %v1229 = vpop.f32.mrf.mxu0
        %v1230 = vadd.f32 0.0, %v1229
        %v1231 = vpop.f32.mrf.mxu0
        %v1232 = vadd.f32 0.0, %v1231
        %v1233 = vpop.f32.mrf.mxu0
        %v1234 = vpop.f32.mrf.mxu0
        %1235 = vdwg.mxu0
        %1236 = vmatprep.subr.bf16.mxu0 %v573
        %1237 = vmatpush1.bf16.msra.mxu0 %v572
        %1238 = vmatprep.subr.bf16.mxu0 %v569
        %1239 = vmatpush1.bf16.msra.mxu0 %v568
        %1240 = vmatprep.subr.bf16.mxu0 %v565
        %1241 = vmatpush1.bf16.msra.mxu0 %v564
        %1242 = vmatprep.subr.bf16.mxu0 %v561
        %1243 = vmatpush1.bf16.msra.mxu0 %v560
        %1244 = vmatprep.subr.bf16.mxu0 %v557
        %1245 = vmatpush1.bf16.msra.mxu0 %v556
        %1246 = vmatprep.subr.bf16.mxu0 %v553
        %1247 = vmatpush1.bf16.msra.mxu0 %v552
        %1248 = vmatprep.subr.bf16.mxu0 %v549
        %1249 = vmatpush1.bf16.msra.mxu0 %v548
        %1250 = vmatprep.subr.bf16.mxu0 %v545
        %1251 = vmatpush1.bf16.msra.mxu0 %v544
        %1252 = vmatprep.subr.bf16.mxu0 0
        %1253 = vmatpush2.bf16.msra.mxu0 0
        %1254 = vmatprep.subr.bf16.mxu0 0
        %1255 = vmatpush2.bf16.msra.mxu0 0
        %1256 = vmatprep.subr.bf16.mxu0 0
        %1257 = vmatpush2.bf16.msra.mxu0 0
        %1258 = vmatprep.subr.bf16.mxu0 0
        %1259 = vmatpush2.bf16.msra.mxu0 0
        %1260 = vmatprep.subr.bf16.mxu0 0
        %1261 = vmatpush2.bf16.msra.mxu0 0
        %1262 = vmatprep.subr.bf16.mxu0 0
        %1263 = vmatpush2.bf16.msra.mxu0 0
        %1264 = vmatprep.subr.bf16.mxu0 0
        %1265 = vmatpush2.bf16.msra.mxu0 0
        %1266 = vmatprep.subr.bf16.mxu0 0
        %1267 = vmatpush2.bf16.msra.mxu0 0
        %1268 = vmatprep.mubr.bf16.mxu0 0
        %1269 = vmatmul.mubr.bf16.gmra.mxu0 %v1194
        %v1270 = vpop.f32.mrf.mxu0
        %v1271 = vadd.f32 0.0, %v1270
        %v1272 = vpop.f32.mrf.mxu0
        %v1273 = vadd.f32 0.0, %v1272
        %v1274 = vpop.f32.mrf.mxu0
        %v1275 = vpop.f32.mrf.mxu0
        %1276 = vdwg.mxu0
        %1277 = vmatprep.subr.bf16.mxu0 %v813
        %1278 = vmatpush1.bf16.msra.mxu0 %v812
        %1279 = vmatprep.subr.bf16.mxu0 %v809
        %1280 = vmatpush1.bf16.msra.mxu0 %v808
        %1281 = vmatprep.subr.bf16.mxu0 %v805
        %1282 = vmatpush1.bf16.msra.mxu0 %v804
        %1283 = vmatprep.subr.bf16.mxu0 %v801
        %1284 = vmatpush1.bf16.msra.mxu0 %v800
        %1285 = vmatprep.subr.bf16.mxu0 %v797
        %1286 = vmatpush1.bf16.msra.mxu0 %v796
        %1287 = vmatprep.subr.bf16.mxu0 %v793
        %1288 = vmatpush1.bf16.msra.mxu0 %v792
        %1289 = vmatprep.subr.bf16.mxu0 %v789
        %1290 = vmatpush1.bf16.msra.mxu0 %v788
        %1291 = vmatprep.subr.bf16.mxu0 %v785
        %1292 = vmatpush1.bf16.msra.mxu0 %v784
        %1293 = vmatprep.subr.bf16.mxu0 0
        %1294 = vmatpush2.bf16.msra.mxu0 0
        %1295 = vmatprep.subr.bf16.mxu0 0
        %1296 = vmatpush2.bf16.msra.mxu0 0
        %1297 = vmatprep.subr.bf16.mxu0 0
        %1298 = vmatpush2.bf16.msra.mxu0 0
        %1299 = vmatprep.subr.bf16.mxu0 0
        %1300 = vmatpush2.bf16.msra.mxu0 0
        %1301 = vmatprep.subr.bf16.mxu0 0
        %1302 = vmatpush2.bf16.msra.mxu0 0
        %1303 = vmatprep.subr.bf16.mxu0 0
        %1304 = vmatpush2.bf16.msra.mxu0 0
        %1305 = vmatprep.subr.bf16.mxu0 0
        %1306 = vmatpush2.bf16.msra.mxu0 0
        %1307 = vmatprep.subr.bf16.mxu0 0
        %1308 = vmatpush2.bf16.msra.mxu0 0
        %1309 = vmatprep.mubr.bf16.mxu0 0
        %1310 = vmatmul.mubr.bf16.gmra.mxu0 %v1193
        %v1311 = vpop.f32.mrf.mxu0
        %v1312 = vadd.f32 %v1230, %v1311
        %v1313 = vpop.f32.mrf.mxu0
        %v1314 = vadd.f32 %v1232, %v1313
        %v1315 = vpop.f32.mrf.mxu0
        %v1316 = vpop.f32.mrf.mxu0
        %1317 = vdwg.mxu0
        %1318 = vmatprep.subr.bf16.mxu0 %v815
        %1319 = vmatpush1.bf16.msra.mxu0 %v814
        %1320 = vmatprep.subr.bf16.mxu0 %v811
        %1321 = vmatpush1.bf16.msra.mxu0 %v810
        %1322 = vmatprep.subr.bf16.mxu0 %v807
        %1323 = vmatpush1.bf16.msra.mxu0 %v806
        %1324 = vmatprep.subr.bf16.mxu0 %v803
        %1325 = vmatpush1.bf16.msra.mxu0 %v802
        %1326 = vmatprep.subr.bf16.mxu0 %v799
        %1327 = vmatpush1.bf16.msra.mxu0 %v798
        %1328 = vmatprep.subr.bf16.mxu0 %v795
        %1329 = vmatpush1.bf16.msra.mxu0 %v794
        %1330 = vmatprep.subr.bf16.mxu0 %v791
        %1331 = vmatpush1.bf16.msra.mxu0 %v790
        %1332 = vmatprep.subr.bf16.mxu0 %v787
        %1333 = vmatpush1.bf16.msra.mxu0 %v786
        %1334 = vmatprep.subr.bf16.mxu0 0
        %1335 = vmatpush2.bf16.msra.mxu0 0
        %1336 = vmatprep.subr.bf16.mxu0 0
        %1337 = vmatpush2.bf16.msra.mxu0 0
        %1338 = vmatprep.subr.bf16.mxu0 0
        %1339 = vmatpush2.bf16.msra.mxu0 0
        %1340 = vmatprep.subr.bf16.mxu0 0
        %1341 = vmatpush2.bf16.msra.mxu0 0
        %1342 = vmatprep.subr.bf16.mxu0 0
        %1343 = vmatpush2.bf16.msra.mxu0 0
        %1344 = vmatprep.subr.bf16.mxu0 0
        %1345 = vmatpush2.bf16.msra.mxu0 0
        %1346 = vmatprep.subr.bf16.mxu0 0
        %1347 = vmatpush2.bf16.msra.mxu0 0
        %1348 = vmatprep.subr.bf16.mxu0 0
        %1349 = vmatpush2.bf16.msra.mxu0 0
        %1350 = vmatprep.mubr.bf16.mxu0 0
        %1351 = vmatmul.mubr.bf16.gmra.mxu0 %v1193
        %v1352 = vpop.f32.mrf.mxu0
        %v1353 = vadd.f32 %v1271, %v1352
        %v1354 = vpop.f32.mrf.mxu0
        %v1355 = vadd.f32 %v1273, %v1354
        %v1356 = vpop.f32.mrf.mxu0
        %v1357 = vpop.f32.mrf.mxu0
        %1358 = vdwg.mxu0
        %v1359 = vadd.f32 %v1312, %v935
        %v1360 = vadd.f32 %v1314, %v939
        %v1361 = vadd.f32 %v1353, %v943
        %v1362 = vadd.f32 %v1355, %v947
        %v1363 = vxor.u32 %v1359, 2147483648
        %v1364 = vxor.u32 %v1360, 2147483648
        %v1365 = vxor.u32 %v1361, 2147483648
        %v1366 = vmul.f32 %v1363, 1.442695
        %v1367 = vpow.pop %v1366
        %v1368 = vmul.f32 %v1364, 1.442695
        %v1369 = vpow.pop %v1368
        %v1370 = vmul.f32 %v1365, 1.442695
        %v1371 = vpow.pop %v1370
        %v1372 = vadd.f32 %v1367, 1.0
        %v1373 = vadd.f32 %v1369, 1.0
        %v1374 = vadd.f32 %v1371, 1.0
        %v1375 = vrcp.pop %v1372
        %v1376 = vmul.f32 1.0, %v1375
        %v1377 = vrcp.pop %v1373
        %v1378 = vmul.f32 1.0, %v1377
        %v1379 = vrcp.pop %v1374
        %v1380 = vmul.f32 1.0, %v1379
        %v1381 = vtanh.pop %v1362
        %v1382 = vmul.f32 %v1378, %v1180
        %v1383 = vmul.f32 %v1381, %v1376
        %v1384 = vadd.f32 %v1382, %v1383
        %v1385 = vtanh.pop %v1384
        %v1386 = vmul.f32 %v1380, %v1385
        %s1387 = sadd.s32 %s376, 2
        %v1388 = vstv %s1387
        %vm1389 = vcmp.eq.s32.totalorder %v375, %v1388
        %v1390 = vsel %vm1389, 1, 0
        %1391 = vset.pattern.permute.xlu0 0
        %1392 = vperm.xlu0 %1391, %v1390
        %v1393 = vpop.permute.xlu0 %1392
        %vm1394 = vcmp.eq.s32.totalorder %v1393, 1
        %v1395 = vsel %vm1394, %v1386, %v1191
        %s1396 = scalar_lea.vmem %s320, 12 [#allocation5]
        %v1397 = vld [vmem:[%s1396] sm:$0xf]
        %v1398 = vpack.c.bf16 %v1386, %v1386
        %1399 = vmatprep.subr.bf16.mxu0 %v571
        %1400 = vmatpush1.bf16.msra.mxu0 %v570
        %1401 = vmatprep.subr.bf16.mxu0 %v567
        %1402 = vmatpush1.bf16.msra.mxu0 %v566
        %1403 = vmatprep.subr.bf16.mxu0 %v563
        %1404 = vmatpush1.bf16.msra.mxu0 %v562
        %1405 = vmatprep.subr.bf16.mxu0 %v559
        %1406 = vmatpush1.bf16.msra.mxu0 %v558
        %1407 = vmatprep.subr.bf16.mxu0 %v555
        %1408 = vmatpush1.bf16.msra.mxu0 %v554
        %1409 = vmatprep.subr.bf16.mxu0 %v551
        %1410 = vmatpush1.bf16.msra.mxu0 %v550
        %1411 = vmatprep.subr.bf16.mxu0 %v547
        %1412 = vmatpush1.bf16.msra.mxu0 %v546
        %1413 = vmatprep.subr.bf16.mxu0 %v543
        %1414 = vmatpush1.bf16.msra.mxu0 %v542
        %1415 = vmatprep.subr.bf16.mxu0 0
        %1416 = vmatpush2.bf16.msra.mxu0 0
        %1417 = vmatprep.subr.bf16.mxu0 0
        %1418 = vmatpush2.bf16.msra.mxu0 0
        %1419 = vmatprep.subr.bf16.mxu0 0
        %1420 = vmatpush2.bf16.msra.mxu0 0
        %1421 = vmatprep.subr.bf16.mxu0 0
        %1422 = vmatpush2.bf16.msra.mxu0 0
        %1423 = vmatprep.subr.bf16.mxu0 0
        %1424 = vmatpush2.bf16.msra.mxu0 0
        %1425 = vmatprep.subr.bf16.mxu0 0
        %1426 = vmatpush2.bf16.msra.mxu0 0
        %1427 = vmatprep.subr.bf16.mxu0 0
        %1428 = vmatpush2.bf16.msra.mxu0 0
        %1429 = vmatprep.subr.bf16.mxu0 0
        %1430 = vmatpush2.bf16.msra.mxu0 0
        %1431 = vmatprep.mubr.bf16.mxu0 0
        %1432 = vmatmul.mubr.bf16.gmra.mxu0 %v1398
        %v1433 = vpop.f32.mrf.mxu0
        %v1434 = vadd.f32 0.0, %v1433
        %v1435 = vpop.f32.mrf.mxu0
        %v1436 = vadd.f32 0.0, %v1435
        %v1437 = vpop.f32.mrf.mxu0
        %v1438 = vpop.f32.mrf.mxu0
        %1439 = vdwg.mxu0
        %1440 = vmatprep.subr.bf16.mxu0 %v573
        %1441 = vmatpush1.bf16.msra.mxu0 %v572
        %1442 = vmatprep.subr.bf16.mxu0 %v569
        %1443 = vmatpush1.bf16.msra.mxu0 %v568
        %1444 = vmatprep.subr.bf16.mxu0 %v565
        %1445 = vmatpush1.bf16.msra.mxu0 %v564
        %1446 = vmatprep.subr.bf16.mxu0 %v561
        %1447 = vmatpush1.bf16.msra.mxu0 %v560
        %1448 = vmatprep.subr.bf16.mxu0 %v557
        %1449 = vmatpush1.bf16.msra.mxu0 %v556
        %1450 = vmatprep.subr.bf16.mxu0 %v553
        %1451 = vmatpush1.bf16.msra.mxu0 %v552
        %1452 = vmatprep.subr.bf16.mxu0 %v549
        %1453 = vmatpush1.bf16.msra.mxu0 %v548
        %1454 = vmatprep.subr.bf16.mxu0 %v545
        %1455 = vmatpush1.bf16.msra.mxu0 %v544
        %1456 = vmatprep.subr.bf16.mxu0 0
        %1457 = vmatpush2.bf16.msra.mxu0 0
        %1458 = vmatprep.subr.bf16.mxu0 0
        %1459 = vmatpush2.bf16.msra.mxu0 0
        %1460 = vmatprep.subr.bf16.mxu0 0
        %1461 = vmatpush2.bf16.msra.mxu0 0
        %1462 = vmatprep.subr.bf16.mxu0 0
        %1463 = vmatpush2.bf16.msra.mxu0 0
        %1464 = vmatprep.subr.bf16.mxu0 0
        %1465 = vmatpush2.bf16.msra.mxu0 0
        %1466 = vmatprep.subr.bf16.mxu0 0
        %1467 = vmatpush2.bf16.msra.mxu0 0
        %1468 = vmatprep.subr.bf16.mxu0 0
        %1469 = vmatpush2.bf16.msra.mxu0 0
        %1470 = vmatprep.subr.bf16.mxu0 0
        %1471 = vmatpush2.bf16.msra.mxu0 0
        %1472 = vmatprep.mubr.bf16.mxu0 0
        %1473 = vmatmul.mubr.bf16.gmra.mxu0 %v1398
        %v1474 = vpop.f32.mrf.mxu0
        %v1475 = vadd.f32 0.0, %v1474
        %v1476 = vpop.f32.mrf.mxu0
        %v1477 = vadd.f32 0.0, %v1476
        %v1478 = vpop.f32.mrf.mxu0
        %v1479 = vpop.f32.mrf.mxu0
        %1480 = vdwg.mxu0
        %1481 = vmatprep.subr.bf16.mxu0 %v813
        %1482 = vmatpush1.bf16.msra.mxu0 %v812
        %1483 = vmatprep.subr.bf16.mxu0 %v809
        %1484 = vmatpush1.bf16.msra.mxu0 %v808
        %1485 = vmatprep.subr.bf16.mxu0 %v805
        %1486 = vmatpush1.bf16.msra.mxu0 %v804
        %1487 = vmatprep.subr.bf16.mxu0 %v801
        %1488 = vmatpush1.bf16.msra.mxu0 %v800
        %1489 = vmatprep.subr.bf16.mxu0 %v797
        %1490 = vmatpush1.bf16.msra.mxu0 %v796
        %1491 = vmatprep.subr.bf16.mxu0 %v793
        %1492 = vmatpush1.bf16.msra.mxu0 %v792
        %1493 = vmatprep.subr.bf16.mxu0 %v789
        %1494 = vmatpush1.bf16.msra.mxu0 %v788
        %1495 = vmatprep.subr.bf16.mxu0 %v785
        %1496 = vmatpush1.bf16.msra.mxu0 %v784
        %1497 = vmatprep.subr.bf16.mxu0 0
        %1498 = vmatpush2.bf16.msra.mxu0 0
        %1499 = vmatprep.subr.bf16.mxu0 0
        %1500 = vmatpush2.bf16.msra.mxu0 0
        %1501 = vmatprep.subr.bf16.mxu0 0
        %1502 = vmatpush2.bf16.msra.mxu0 0
        %1503 = vmatprep.subr.bf16.mxu0 0
        %1504 = vmatpush2.bf16.msra.mxu0 0
        %1505 = vmatprep.subr.bf16.mxu0 0
        %1506 = vmatpush2.bf16.msra.mxu0 0
        %1507 = vmatprep.subr.bf16.mxu0 0
        %1508 = vmatpush2.bf16.msra.mxu0 0
        %1509 = vmatprep.subr.bf16.mxu0 0
        %1510 = vmatpush2.bf16.msra.mxu0 0
        %1511 = vmatprep.subr.bf16.mxu0 0
        %1512 = vmatpush2.bf16.msra.mxu0 0
        %1513 = vmatprep.mubr.bf16.mxu0 0
        %1514 = vmatmul.mubr.bf16.gmra.mxu0 %v1397
        %v1515 = vpop.f32.mrf.mxu0
        %v1516 = vadd.f32 %v1434, %v1515
        %v1517 = vpop.f32.mrf.mxu0
        %v1518 = vadd.f32 %v1436, %v1517
        %v1519 = vpop.f32.mrf.mxu0
        %v1520 = vpop.f32.mrf.mxu0
        %1521 = vdwg.mxu0
        %1522 = vmatprep.subr.bf16.mxu0 %v815
        %1523 = vmatpush1.bf16.msra.mxu0 %v814
        %1524 = vmatprep.subr.bf16.mxu0 %v811
        %1525 = vmatpush1.bf16.msra.mxu0 %v810
        %1526 = vmatprep.subr.bf16.mxu0 %v807
        %1527 = vmatpush1.bf16.msra.mxu0 %v806
        %1528 = vmatprep.subr.bf16.mxu0 %v803
        %1529 = vmatpush1.bf16.msra.mxu0 %v802
        %1530 = vmatprep.subr.bf16.mxu0 %v799
        %1531 = vmatpush1.bf16.msra.mxu0 %v798
        %1532 = vmatprep.subr.bf16.mxu0 %v795
        %1533 = vmatpush1.bf16.msra.mxu0 %v794
        %1534 = vmatprep.subr.bf16.mxu0 %v791
        %1535 = vmatpush1.bf16.msra.mxu0 %v790
        %1536 = vmatprep.subr.bf16.mxu0 %v787
        %1537 = vmatpush1.bf16.msra.mxu0 %v786
        %1538 = vmatprep.subr.bf16.mxu0 0
        %1539 = vmatpush2.bf16.msra.mxu0 0
        %1540 = vmatprep.subr.bf16.mxu0 0
        %1541 = vmatpush2.bf16.msra.mxu0 0
        %1542 = vmatprep.subr.bf16.mxu0 0
        %1543 = vmatpush2.bf16.msra.mxu0 0
        %1544 = vmatprep.subr.bf16.mxu0 0
        %1545 = vmatpush2.bf16.msra.mxu0 0
        %1546 = vmatprep.subr.bf16.mxu0 0
        %1547 = vmatpush2.bf16.msra.mxu0 0
        %1548 = vmatprep.subr.bf16.mxu0 0
        %1549 = vmatpush2.bf16.msra.mxu0 0
        %1550 = vmatprep.subr.bf16.mxu0 0
        %1551 = vmatpush2.bf16.msra.mxu0 0
        %1552 = vmatprep.subr.bf16.mxu0 0
        %1553 = vmatpush2.bf16.msra.mxu0 0
        %1554 = vmatprep.mubr.bf16.mxu0 0
        %1555 = vmatmul.mubr.bf16.gmra.mxu0 %v1397
        %v1556 = vpop.f32.mrf.mxu0
        %v1557 = vadd.f32 %v1475, %v1556
        %v1558 = vpop.f32.mrf.mxu0
        %v1559 = vadd.f32 %v1477, %v1558
        %v1560 = vpop.f32.mrf.mxu0
        %v1561 = vpop.f32.mrf.mxu0
        %1562 = vdwg.mxu0
        %v1563 = vadd.f32 %v1516, %v935
        %v1564 = vadd.f32 %v1518, %v939
        %v1565 = vadd.f32 %v1557, %v943
        %v1566 = vadd.f32 %v1559, %v947
        %v1567 = vxor.u32 %v1563, 2147483648
        %v1568 = vxor.u32 %v1564, 2147483648
        %v1569 = vxor.u32 %v1565, 2147483648
        %v1570 = vmul.f32 %v1567, 1.442695
        %v1571 = vpow.pop %v1570
        %v1572 = vmul.f32 %v1568, 1.442695
        %v1573 = vpow.pop %v1572
        %v1574 = vmul.f32 %v1569, 1.442695
        %v1575 = vpow.pop %v1574
        %v1576 = vadd.f32 %v1571, 1.0
        %v1577 = vadd.f32 %v1573, 1.0
        %v1578 = vadd.f32 %v1575, 1.0
        %v1579 = vrcp.pop %v1576
        %v1580 = vmul.f32 1.0, %v1579
        %v1581 = vrcp.pop %v1577
        %v1582 = vmul.f32 1.0, %v1581
        %v1583 = vrcp.pop %v1578
        %v1584 = vmul.f32 1.0, %v1583
        %v1585 = vtanh.pop %v1566
        %v1586 = vmul.f32 %v1582, %v1384
        %v1587 = vmul.f32 %v1585, %v1580
        %v1588 = vadd.f32 %v1586, %v1587
        %v1589 = vtanh.pop %v1588
        %v1590 = vmul.f32 %v1584, %v1589
        %s1591 = sadd.s32 %s376, 3
        %v1592 = vstv %s1591
        %vm1593 = vcmp.eq.s32.totalorder %v375, %v1592
        %v1594 = vsel %vm1593, 1, 0
        %1595 = vset.pattern.permute.xlu0 0
        %1596 = vperm.xlu0 %1595, %v1594
        %v1597 = vpop.permute.xlu0 %1596
        %vm1598 = vcmp.eq.s32.totalorder %v1597, 1
        %v1599 = vsel %vm1598, %v1590, %v1395
        %1600 = vst [vmem:[#allocation2] sm:$0xff] %v1590
        %1601 = vst [vmem:[#allocation3] sm:$0xff] %v1588
        %1602 = vst [vmem:[#allocation4] sm:$0xff] %v1599
        %p1603 = scmp.eq.s32.totalorder %s29, 1
        // Predicated region
        $region69: #{tpu_custom_call.1} parent=47 // pred_check
          %p1604 = pneg %p1603
        $region70: #{tpu_custom_call.1} parent=47 // pred_check_branch
          %1606 = sbr.rel (%p1604) target = $region72
        $region71: #{tpu_custom_call.1} parent=47 // pred_region
          %v1607 = vpack.c.bf16 %v1599, %v1599
          %v1608 = vld [vmem:[#allocation11] sm:$0xf]
          %v1609 = vld [vmem:[#allocation11 + $0x4] sm:$0xf]
          %v1610 = vld [vmem:[#allocation11 + $0x8] sm:$0xf]
          %v1611 = vld [vmem:[#allocation11 + $0xc] sm:$0xf]
          %v1612 = vld [vmem:[#allocation11 + $0x10] sm:$0xf]
          %v1613 = vld [vmem:[#allocation11 + $0x14] sm:$0xf]
          %v1614 = vld [vmem:[#allocation11 + $0x18] sm:$0xf]
          %v1615 = vld [vmem:[#allocation11 + $0x1c] sm:$0xf]
          %v1616 = vld [vmem:[#allocation11 + $0x20] sm:$0xf]
          %v1617 = vld [vmem:[#allocation11 + $0x24] sm:$0xf]
          %v1618 = vld [vmem:[#allocation11 + $0x28] sm:$0xf]
          %v1619 = vld [vmem:[#allocation11 + $0x2c] sm:$0xf]
          %v1620 = vld [vmem:[#allocation11 + $0x30] sm:$0xf]
          %v1621 = vld [vmem:[#allocation11 + $0x34] sm:$0xf]
          %v1622 = vld [vmem:[#allocation11 + $0x38] sm:$0xf]
          %v1623 = vld [vmem:[#allocation11 + $0x3c] sm:$0xf]
          %v1624 = vld [vmem:[%s6] sm:$0x1]
          %v1626 = vlaneseq
          %v1627 = vshrl.u32 %v1626, 7
          %v1628 = vsub.s32 0, %v1627
          %v1629 = vrot.slane %v1624, %v1628
          %v1647 = vunpack.c.l.b16 %v1608
          %v1648 = vunpack.c.l.b16 %v1609
          %v1649 = vunpack.c.l.b16 %v1610
          %v1650 = vunpack.c.l.b16 %v1611
          %v1651 = vunpack.c.l.b16 %v1612
          %v1652 = vunpack.c.l.b16 %v1613
          %v1653 = vunpack.c.l.b16 %v1614
          %v1654 = vunpack.c.l.b16 %v1615
          %v1655 = vunpack.c.l.b16 %v1616
          %v1656 = vunpack.c.l.b16 %v1617
          %v1657 = vunpack.c.l.b16 %v1618
          %v1658 = vunpack.c.l.b16 %v1619
          %v1659 = vunpack.c.l.b16 %v1620
          %v1660 = vunpack.c.l.b16 %v1621
          %v1661 = vunpack.c.l.b16 %v1622
          %v1662 = vunpack.c.l.b16 %v1623
          %v1663 = vpack.c.b16 %v1648, %v1647
          %v1664 = vpack.c.b16 %v1650, %v1649
          %v1665 = vpack.c.b16 %v1652, %v1651
          %v1666 = vpack.c.b16 %v1654, %v1653
          %v1667 = vpack.c.b16 %v1656, %v1655
          %v1668 = vpack.c.b16 %v1658, %v1657
          %v1669 = vpack.c.b16 %v1660, %v1659
          %v1670 = vpack.c.b16 %v1662, %v1661
          %1679 = vmatprep.subr.bf16.mxu0 0
          %1680 = vmatpush1.bf16.msra.mxu0 %v1670
          %1681 = vmatprep.subr.bf16.mxu0 0
          %1682 = vmatpush1.bf16.msra.mxu0 %v1669
          %1683 = vmatprep.subr.bf16.mxu0 0
          %1684 = vmatpush1.bf16.msra.mxu0 %v1668
          %1685 = vmatprep.subr.bf16.mxu0 0
          %1686 = vmatpush1.bf16.msra.mxu0 %v1667
          %1687 = vmatprep.subr.bf16.mxu0 0
          %1688 = vmatpush1.bf16.msra.mxu0 %v1666
          %1689 = vmatprep.subr.bf16.mxu0 0
          %1690 = vmatpush1.bf16.msra.mxu0 %v1665
          %1691 = vmatprep.subr.bf16.mxu0 0
          %1692 = vmatpush1.bf16.msra.mxu0 %v1664
          %1693 = vmatprep.subr.bf16.mxu0 0
          %1694 = vmatpush1.bf16.msra.mxu0 %v1663
          %1695 = vmatprep.subr.bf16.mxu0 0
          %1696 = vmatpush2.bf16.msra.mxu0 0
          %1697 = vmatprep.subr.bf16.mxu0 0
          %1698 = vmatpush2.bf16.msra.mxu0 0
          %1699 = vmatprep.subr.bf16.mxu0 0
          %1700 = vmatpush2.bf16.msra.mxu0 0
          %1701 = vmatprep.subr.bf16.mxu0 0
          %1702 = vmatpush2.bf16.msra.mxu0 0
          %1703 = vmatprep.subr.bf16.mxu0 0
          %1704 = vmatpush2.bf16.msra.mxu0 0
          %1705 = vmatprep.subr.bf16.mxu0 0
          %1706 = vmatpush2.bf16.msra.mxu0 0
          %1707 = vmatprep.subr.bf16.mxu0 0
          %1708 = vmatpush2.bf16.msra.mxu0 0
          %1709 = vmatprep.subr.bf16.mxu0 0
          %1710 = vmatpush2.bf16.msra.mxu0 0
          %1711 = vmatprep.mubr.bf16.mxu0 0
          %1712 = vmatmul.mubr.bf16.gmra.mxu0 %v1607
          %v1713 = vpop.f32.mrf.mxu0
          %v1714 = vadd.f32 %v1629, %v1713
          %v1715 = vpop.f32.mrf.mxu0
          %v1716 = vpop.f32.mrf.mxu0
          %v1717 = vpop.f32.mrf.mxu0
          %1718 = vdwg.mxu0
          %1719 = vst [vmem:[#allocation13] sm:$0xff] %v1714
        $region72: #{tpu_custom_call.1} parent=47 // pred_fallthru
          _
        // Predicated region
        $region73: #{tpu_custom_call.1} parent=47 // pred_check
          %p1720 = pneg %p213
        $region74: #{tpu_custom_call.1} parent=47 // pred_check_branch
          %1722 = sbr.rel (%p1720) target = $region76
        $region75: #{tpu_custom_call.1} parent=47 // pred_region
          %s1724 = ssub.s32 128, 128
          %1725 = vsyncadd [#allocation7], %s1724
          %s1726 = smul.addr %s28, 128
          %s1727 = scalar_lea.hbm %s7, %s1726
          %s1729 = sshll.u32 [#allocation13], 4
          %s1730 = int_to_ptr.vmem [resolvable:$true] %s1729
          %1732 = dma.vmem_to_hbm [thread:$0]  %s1730, 128, %s1727, [#allocation7]
        $region76: #{tpu_custom_call.1} parent=47 // pred_fallthru
          _
        // Predicated region
        $region77: #{tpu_custom_call.1} parent=47 // pred_check
          %p1733 = pneg %p213
        $region78: #{tpu_custom_call.1} parent=47 // pred_check_branch
          %1735 = sbr.rel (%p1733) target = $region80
        $region79: #{tpu_custom_call.1} parent=47 // pred_region
          %1736 = dma.done [#allocation7], 128
        $region80: #{tpu_custom_call.1} parent=47 // pred_fallthru
          _
      $region48: #{tpu_custom_call.1} parent=5 // pred_fallthru
        _
      %p1737 = scmp.le.s32.totalorder 2, %s19
      // Predicated region
      $region81: #{tpu_custom_call.1} parent=5 // pred_check
        %p1738 = pneg %p1737
      $region82: #{tpu_custom_call.1} parent=5 // pred_check_branch
        %1740 = sbr.rel (%p1738) target = $region84
      $region83: #{tpu_custom_call.1} parent=5 // pred_region
        %s1741 = ssub.s32 %s19, 2
      $region84: #{tpu_custom_call.1} parent=5 // pred_fallthru
        _
    $region6: #{tpu_custom_call.1} parent=1 // loop_footer
      %s23 = sadd.s32 1, %s19
    $region7: #{tpu_custom_call.1} parent=1 // loop_footer_branch
      %18 = sbr.rel target = $region3
    $region8: #{tpu_custom_call.1} parent=1 // loop_exit
      _
    %1742 = vsyncpa [#allocation6], 1
    %s1743 = scalar_lea.sflag [#allocation6], 1
    %1744 = vsyncpa %s1743, 1
    %1745 = vsyncpa [#allocation9], 1
    %1746 = vsyncpa [#allocation12], 1
    %1747 = vsyncpa [#allocation7], 1
    %s1748 = scalar_lea.sflag [#allocation7], 1
    %1749 = vsyncpa %s1748, 1

</llo_original>
